<compile_context>
chip_gen: v6e
topology: v6e:2x2x1
jax: 0.10.0
libtpu: 0.0.40
codegen_flags: <defaults>
</compile_context>

<pallas_src>
import functools

import jax
import jax.numpy as jnp
from jax import lax
from jax.experimental import pallas as pl
from jax.experimental.pallas import tpu as pltpu


# ----------------------------------------------------------------------------
# Fused kernel: whole Extractor forward for one batch element
# ----------------------------------------------------------------------------
def _extractor_fused_kernel(*refs, T, eps, neg_slope, cfgs):
    """refs = (x_ref, eeg_w_ref, eeg_b_ref,
               [w_i, b_i, gamma_i, beta_i] * n_blocks,
               o_ref, pad_ref)

    x_ref:   (Cin0, T)    one sample, channels on sublanes, time on lanes
    eeg_w:   (Cin0, Cin0) Conv1d(kernel_size=1) == channel matmul
    eeg_b:   (Cin0, 1)
    w_i:     (Cout, K*Cin) torch (Cout, Cin, K) with tap index outer:
                           w_i[co, k*Cin + ci] == torch_w[co, ci, k]
    b_i:     (Cout, 1)
    gamma_i/beta_i: (Cout, T)   LayerNorm([C, T]) affine params (torch layout)
    o_ref:   (Cout_last, T)
    pad_ref: VMEM scratch (C_max, T + PAD_MAX) staging the zero-padded
             activation of each layer (PyTorch 'same' asymmetric padding).
    """
    n_blocks = len(cfgs)
    x_ref, eeg_w_ref, eeg_b_ref = refs[0], refs[1], refs[2]
    blk_refs = refs[3:3 + 4 * n_blocks]
    o_ref = refs[3 + 4 * n_blocks]
    pad_ref = refs[3 + 4 * n_blocks + 1]

    # self.eeg : Conv1d(kernel_size=1)  ->  (Cin0, Cin0) @ (Cin0, T) + bias
    act = jnp.dot(eeg_w_ref[...], x_ref[...],
                  preferred_element_type=jnp.float32) + eeg_b_ref[...]

    # Static Python loop over layers (shapes differ per layer); activations
    # stay in VMEM / vregs the whole time.
    for i, (cin, cout, K, dil, left, right) in enumerate(cfgs):
        w_ref, b_ref, g_ref, be_ref = blk_refs[4 * i:4 * i + 4]

        # Stage zero-padded activation: pad_ref[:cin, :left+T+right] holds
        # [zeros(left) | act | zeros(right)]  (left = total//2, extra pad on
        # the right -- exactly PyTorch's Conv1d(padding='same') behaviour).
        if left > 0:
            pad_ref[:cin, :left] = jnp.zeros((cin, left), jnp.float32)
        if right > 0:
            pad_ref[:cin, left + T:left + T + right] = jnp.zeros(
                (cin, right), jnp.float32)
        pad_ref[:cin, left:left + T] = act

        # im2col: row block k of the (K*cin, T) slab is x_pad[:, k*dil:k*dil+T]
        xcol = jnp.concatenate(
            [pad_ref[:cin, k * dil:k * dil + T] for k in range(K)], axis=0)

        # One MXU matmul per layer: (Cout, K*cin) @ (K*cin, T) + bias.
        acc = jnp.dot(w_ref[...], xcol,
                      preferred_element_type=jnp.float32) + b_ref[...]

        # LayerNorm over the full (Cout, T) slab -- single-pass stats in f32.
        n = float(cout * T)
        s = jnp.sum(acc)
        ss = jnp.sum(acc * acc)
        mean = s / n
        var = jnp.maximum(ss / n - mean * mean, 0.0)
        y = (acc - mean) * lax.rsqrt(var + eps)
        y = y * g_ref[...] + be_ref[...]

        # LeakyReLU (negative_slope = 0.01): max(y, slope*y) == leaky_relu(y)
        # for 0 < slope < 1.
        act = jnp.maximum(y, neg_slope * y)

    o_ref[...] = act.astype(o_ref.dtype)


# ----------------------------------------------------------------------------
# Wrapper: single pallas_call, grid over batch
# ----------------------------------------------------------------------------
def extractor_forward(params, x_bct, *, kernels, dilation_rate=1,
                      eps=1e-5, neg_slope=0.01):
    """x_bct: (B, C, T) as in PyTorch; returns (B, filters[-1], T)."""
    B, cin0, T = x_bct.shape
    blocks = params["blocks"]
    assert len(blocks) == len(kernels)

    # Static per-layer config: (cin, cout, K, dilation, left_pad, right_pad).
    cfgs = []
    cin = cin0
    for p, K in zip(blocks, kernels):
        cout = p["gamma"].shape[0]
        total = dilation_rate * (K - 1)
        left = total // 2
        cfgs.append((cin, cout, K, dilation_rate, left, total - left))
        cin = cout
    cout_last = cfgs[-1][1]
    c_pad = max(c[0] for c in cfgs)
    pad_max = max(c[3] * (c[2] - 1) for c in cfgs)

    kern = functools.partial(_extractor_fused_kernel, T=T, eps=eps,
                             neg_slope=neg_slope, cfgs=tuple(cfgs))

    in_specs = [
        pl.BlockSpec((None, cin0, T), lambda b: (b, 0, 0)),
        pl.BlockSpec((cin0, cin0), lambda b: (0, 0)),
        pl.BlockSpec((cin0, 1), lambda b: (0, 0)),
    ]
    args = [x_bct, params["eeg_w"], params["eeg_b"]]
    for (ci, co, K, _, _, _), p in zip(cfgs, blocks):
        in_specs += [
            pl.BlockSpec((co, K * ci), lambda b: (0, 0)),
            pl.BlockSpec((co, 1), lambda b: (0, 0)),
            pl.BlockSpec((co, T), lambda b: (0, 0)),
            pl.BlockSpec((co, T), lambda b: (0, 0)),
        ]
        args += [p["w"], p["b"], p["gamma"], p["beta"]]

    return pl.pallas_call(
        kern,
        out_shape=jax.ShapeDtypeStruct((B, cout_last, T), x_bct.dtype),
        grid_spec=pltpu.PrefetchScalarGridSpec(
            num_scalar_prefetch=0,
            grid=(B,),
            in_specs=in_specs,
            out_specs=pl.BlockSpec((None, cout_last, T), lambda b: (b, 0, 0)),
            scratch_shapes=[pltpu.VMEM((c_pad, T + pad_max), jnp.float32)],
        ),
        compiler_params=pltpu.CompilerParams(
            dimension_semantics=("parallel",)),
    )(*args)


# ----------------------------------------------------------------------------
# Parameter init (deterministic, PyTorch-style uniform bounds; synthetic)
# ----------------------------------------------------------------------------
def init_extractor_params(key, *, filters, kernels, input_channels,
                          time_dimension, dtype=jnp.float32):
    params = {}
    k_w, k_b, key = jax.random.split(key, 3)
    bound = 1.0 / float(input_channels * 1) ** 0.5
    # eeg conv: torch weight (Cout, Cin, 1) stored here as (Cout, Cin)
    params["eeg_w"] = jax.random.uniform(
        k_w, (input_channels, input_channels), dtype, -bound, bound)
    params["eeg_b"] = jax.random.uniform(
        k_b, (input_channels, 1), dtype, -bound, bound)

    blocks = []
    cin = input_channels
    for f, K in zip(filters, kernels):
        k_w, k_b, key = jax.random.split(key, 3)
        bound = 1.0 / float(cin * K) ** 0.5
        # torch weight (Cout, Cin, K) stored pre-reshaped as (Cout, K*Cin) with
        # tap index outer:  w[co, k*cin + ci] == torch_w[co, ci, k]
        w = jax.random.uniform(k_w, (f, K * cin), dtype, -bound, bound)
        b = jax.random.uniform(k_b, (f, 1), dtype, -bound, bound)
        # LayerNorm([C, T]): weight=1, bias=0, stored in torch (C, T) layout
        gamma = jnp.ones((f, time_dimension), dtype)
        beta = jnp.zeros((f, time_dimension), dtype)
        blocks.append({"w": w, "b": b, "gamma": gamma, "beta": beta})
        cin = f
    params["blocks"] = blocks
    return params


if __name__ == "__main__":
    # Small config consistent with the module (scaled-down filters/kernels/T).
    B = 2
    input_channels = 8
    T = 32                      # time_dimension
    filters = (16, 16, 8)
    kernels = (7, 6, 5)         # mix of odd/even to exercise 'same' padding

    key = jax.random.PRNGKey(0)
    kx, kp = jax.random.split(key)
    x = jax.random.normal(kx, (B, input_channels, T), jnp.float32)
    params = init_extractor_params(
        kp, filters=filters, kernels=kernels,
        input_channels=input_channels, time_dimension=T)

    out = extractor_forward(params, x, kernels=kernels, dilation_rate=1)
    out = jax.block_until_ready(out)
    assert out.shape == (B, filters[-1], T), out.shape
    assert bool(jnp.all(jnp.isfinite(out)))
    print("KERNEL_OK")
</pallas_src>

<mosaic_0001>
module attributes {stable_mosaic.version = 11 : i64} {
  func.func @_extractor_fused_kernel(%arg0: i32, %arg1: memref<1x8x32xf32, #tpu.memory_space<vmem>>, %arg2: memref<8x8xf32, #tpu.memory_space<vmem>>, %arg3: memref<8x1xf32, #tpu.memory_space<vmem>>, %arg4: memref<16x56xf32, #tpu.memory_space<vmem>>, %arg5: memref<16x1xf32, #tpu.memory_space<vmem>>, %arg6: memref<16x32xf32, #tpu.memory_space<vmem>>, %arg7: memref<16x32xf32, #tpu.memory_space<vmem>>, %arg8: memref<16x96xf32, #tpu.memory_space<vmem>>, %arg9: memref<16x1xf32, #tpu.memory_space<vmem>>, %arg10: memref<16x32xf32, #tpu.memory_space<vmem>>, %arg11: memref<16x32xf32, #tpu.memory_space<vmem>>, %arg12: memref<8x80xf32, #tpu.memory_space<vmem>>, %arg13: memref<8x1xf32, #tpu.memory_space<vmem>>, %arg14: memref<8x32xf32, #tpu.memory_space<vmem>>, %arg15: memref<8x32xf32, #tpu.memory_space<vmem>>, %arg16: memref<1x8x32xf32, #tpu.memory_space<vmem>>, %arg17: memref<16x38xf32, #tpu.memory_space<vmem>>) attributes {dimension_semantics = [#tpu.dimension_semantics<parallel>], iteration_bounds = array<i64: 2>, scalar_prefetch = 0 : i64, scratch_operands = 1 : i64, tpu.core_type = #tpu.core_type<tc>, window_params = [{transform_indices = @transform_0, window_bounds = array<i64: 1, 8, 32>}, {pipeline_mode = #tpu.pipeline_mode<synchronous>, transform_indices = @transform_1, window_bounds = array<i64: 8, 8>}, {pipeline_mode = #tpu.pipeline_mode<synchronous>, transform_indices = @transform_2, window_bounds = array<i64: 8, 1>}, {pipeline_mode = #tpu.pipeline_mode<synchronous>, transform_indices = @transform_3, window_bounds = array<i64: 16, 56>}, {pipeline_mode = #tpu.pipeline_mode<synchronous>, transform_indices = @transform_4, window_bounds = array<i64: 16, 1>}, {pipeline_mode = #tpu.pipeline_mode<synchronous>, transform_indices = @transform_5, window_bounds = array<i64: 16, 32>}, {pipeline_mode = #tpu.pipeline_mode<synchronous>, transform_indices = @transform_6, window_bounds = array<i64: 16, 32>}, {pipeline_mode = #tpu.pipeline_mode<synchronous>, transform_indices = @transform_7, window_bounds = array<i64: 16, 96>}, {pipeline_mode = #tpu.pipeline_mode<synchronous>, transform_indices = @transform_8, window_bounds = array<i64: 16, 1>}, {pipeline_mode = #tpu.pipeline_mode<synchronous>, transform_indices = @transform_9, window_bounds = array<i64: 16, 32>}, {pipeline_mode = #tpu.pipeline_mode<synchronous>, transform_indices = @transform_10, window_bounds = array<i64: 16, 32>}, {pipeline_mode = #tpu.pipeline_mode<synchronous>, transform_indices = @transform_11, window_bounds = array<i64: 8, 80>}, {pipeline_mode = #tpu.pipeline_mode<synchronous>, transform_indices = @transform_12, window_bounds = array<i64: 8, 1>}, {pipeline_mode = #tpu.pipeline_mode<synchronous>, transform_indices = @transform_13, window_bounds = array<i64: 8, 32>}, {pipeline_mode = #tpu.pipeline_mode<synchronous>, transform_indices = @transform_14, window_bounds = array<i64: 8, 32>}, {transform_indices = @transform_15, window_bounds = array<i64: 1, 8, 32>}]} {
    %c0 = arith.constant 0 : index
    %c0_0 = arith.constant 0 : index
    %0 = vector.load %arg2[%c0, %c0_0] : memref<8x8xf32, #tpu.memory_space<vmem>>, vector<8x8xf32>
    %c0_1 = arith.constant 0 : index
    %c0_2 = arith.constant 0 : index
    %c0_3 = arith.constant 0 : index
    %1 = vector.load %arg1[%c0_1, %c0_2, %c0_3] : memref<1x8x32xf32, #tpu.memory_space<vmem>>, vector<1x8x32xf32>
    %2 = vector.shape_cast %1 : vector<1x8x32xf32> to vector<8x32xf32>
    %cst = arith.constant dense<0.000000e+00> : vector<8x32xf32>
    %3 = tpu.matmul %0, %2, %cst {dimension_numbers = #tpu.dot_dimension_numbers<[1], [0], [0], [1], [0, 0, 1, 1], [], []>} : vector<8x8xf32>, vector<8x32xf32>, vector<8x32xf32> -> vector<8x32xf32>
    %c0_4 = arith.constant 0 : index
    %c0_5 = arith.constant 0 : index
    %4 = vector.load %arg3[%c0_4, %c0_5] : memref<8x1xf32, #tpu.memory_space<vmem>>, vector<8x1xf32>
    %5 = vector.broadcast %4 : vector<8x1xf32> to vector<8x32xf32>
    %6 = arith.addf %3, %5 : vector<8x32xf32>
    %cst_6 = arith.constant 0.000000e+00 : f32
    %7 = vector.broadcast %cst_6 : f32 to vector<8x3xf32>
    %c0_7 = arith.constant 0 : index
    %c0_8 = arith.constant 0 : index
    %8 = vector.load %arg17[%c0_7, %c0_8] : memref<16x38xf32, #tpu.memory_space<vmem>>, vector<8x3xf32>
    tpu.vector_store %arg17[%c0_7, %c0_8], %7 {strides = array<i32>} : memref<16x38xf32, #tpu.memory_space<vmem>>, vector<8x3xf32>,
    %cst_9 = arith.constant 0.000000e+00 : f32
    %9 = vector.broadcast %cst_9 : f32 to vector<8x3xf32>
    %c0_10 = arith.constant 0 : index
    %c35 = arith.constant 35 : index
    %10 = vector.load %arg17[%c0_10, %c35] : memref<16x38xf32, #tpu.memory_space<vmem>>, vector<8x3xf32>
    tpu.vector_store %arg17[%c0_10, %c35], %9 {strides = array<i32>} : memref<16x38xf32, #tpu.memory_space<vmem>>, vector<8x3xf32>,
    %c0_11 = arith.constant 0 : index
    %c3 = arith.constant 3 : index
    %11 = vector.load %arg17[%c0_11, %c3] : memref<16x38xf32, #tpu.memory_space<vmem>>, vector<8x32xf32>
    tpu.vector_store %arg17[%c0_11, %c3], %6 {strides = array<i32>} : memref<16x38xf32, #tpu.memory_space<vmem>>, vector<8x32xf32>,
    %c0_12 = arith.constant 0 : index
    %c0_13 = arith.constant 0 : index
    %12 = vector.load %arg17[%c0_12, %c0_13] : memref<16x38xf32, #tpu.memory_space<vmem>>, vector<8x32xf32>
    %c0_14 = arith.constant 0 : index
    %c1 = arith.constant 1 : index
    %13 = vector.load %arg17[%c0_14, %c1] : memref<16x38xf32, #tpu.memory_space<vmem>>, vector<8x32xf32>
    %c0_15 = arith.constant 0 : index
    %c2 = arith.constant 2 : index
    %14 = vector.load %arg17[%c0_15, %c2] : memref<16x38xf32, #tpu.memory_space<vmem>>, vector<8x32xf32>
    %c0_16 = arith.constant 0 : index
    %c3_17 = arith.constant 3 : index
    %15 = vector.load %arg17[%c0_16, %c3_17] : memref<16x38xf32, #tpu.memory_space<vmem>>, vector<8x32xf32>
    %c0_18 = arith.constant 0 : index
    %c4 = arith.constant 4 : index
    %16 = vector.load %arg17[%c0_18, %c4] : memref<16x38xf32, #tpu.memory_space<vmem>>, vector<8x32xf32>
    %c0_19 = arith.constant 0 : index
    %c5 = arith.constant 5 : index
    %17 = vector.load %arg17[%c0_19, %c5] : memref<16x38xf32, #tpu.memory_space<vmem>>, vector<8x32xf32>
    %c0_20 = arith.constant 0 : index
    %c6 = arith.constant 6 : index
    %18 = vector.load %arg17[%c0_20, %c6] : memref<16x38xf32, #tpu.memory_space<vmem>>, vector<8x32xf32>
    %19 = tpu.concatenate %12, %13, %14, %15, %16, %17, %18 in 0 : vector<8x32xf32>, vector<8x32xf32>, vector<8x32xf32>, vector<8x32xf32>, vector<8x32xf32>, vector<8x32xf32>, vector<8x32xf32> -> vector<56x32xf32>
    %c0_21 = arith.constant 0 : index
    %c0_22 = arith.constant 0 : index
    %20 = vector.load %arg4[%c0_21, %c0_22] : memref<16x56xf32, #tpu.memory_space<vmem>>, vector<16x56xf32>
    %cst_23 = arith.constant dense<0.000000e+00> : vector<16x32xf32>
    %21 = tpu.matmul %20, %19, %cst_23 {dimension_numbers = #tpu.dot_dimension_numbers<[1], [0], [0], [1], [0, 0, 1, 1], [], []>} : vector<16x56xf32>, vector<56x32xf32>, vector<16x32xf32> -> vector<16x32xf32>
    %c0_24 = arith.constant 0 : index
    %c0_25 = arith.constant 0 : index
    %22 = vector.load %arg5[%c0_24, %c0_25] : memref<16x1xf32, #tpu.memory_space<vmem>>, vector<16x1xf32>
    %23 = vector.broadcast %22 : vector<16x1xf32> to vector<16x32xf32>
    %24 = arith.addf %21, %23 : vector<16x32xf32>
    %25 = vector.shape_cast %24 : vector<16x32xf32> to vector<1x16x32xf32>
    %cst_26 = arith.constant dense<0.000000e+00> : vector<1xf32>
    %26 = vector.multi_reduction <add>, %25, %cst_26 [1, 2] : vector<1x16x32xf32> to vector<1xf32>
    %27 = vector.shape_cast %26 : vector<1xf32> to vector<1x1x1xf32>
    %28 = vector.extract %27[0, 0, 0] : f32 from vector<1x1x1xf32>
    %29 = arith.mulf %24, %24 : vector<16x32xf32>
    %30 = vector.shape_cast %29 : vector<16x32xf32> to vector<1x16x32xf32>
    %cst_27 = arith.constant dense<0.000000e+00> : vector<1xf32>
    %31 = vector.multi_reduction <add>, %30, %cst_27 [1, 2] : vector<1x16x32xf32> to vector<1xf32>
    %32 = vector.shape_cast %31 : vector<1xf32> to vector<1x1x1xf32>
    %33 = vector.extract %32[0, 0, 0] : f32 from vector<1x1x1xf32>
    %cst_28 = arith.constant 5.120000e+02 : f32
    %34 = arith.divf %28, %cst_28 : f32
    %cst_29 = arith.constant 5.120000e+02 : f32
    %35 = arith.divf %33, %cst_29 : f32
    %36 = arith.mulf %34, %34 : f32
    %37 = arith.subf %35, %36 : f32
    %cst_30 = arith.constant 0.000000e+00 : f32
    %38 = arith.maximumf %37, %cst_30 : f32
    %39 = vector.broadcast %34 : f32 to vector<16x32xf32>
    %40 = arith.subf %24, %39 : vector<16x32xf32>
    %cst_31 = arith.constant 9.99999974E-6 : f32
    %41 = arith.addf %38, %cst_31 : f32
    %42 = math.rsqrt %41 : f32
    %43 = vector.broadcast %42 : f32 to vector<16x32xf32>
    %44 = arith.mulf %40, %43 : vector<16x32xf32>
    %c0_32 = arith.constant 0 : index
    %c0_33 = arith.constant 0 : index
    %45 = vector.load %arg6[%c0_32, %c0_33] : memref<16x32xf32, #tpu.memory_space<vmem>>, vector<16x32xf32>
    %46 = arith.mulf %44, %45 : vector<16x32xf32>
    %c0_34 = arith.constant 0 : index
    %c0_35 = arith.constant 0 : index
    %47 = vector.load %arg7[%c0_34, %c0_35] : memref<16x32xf32, #tpu.memory_space<vmem>>, vector<16x32xf32>
    %48 = arith.addf %46, %47 : vector<16x32xf32>
    %cst_36 = arith.constant 0.00999999977 : f32
    %49 = vector.broadcast %cst_36 : f32 to vector<16x32xf32>
    %50 = arith.mulf %49, %48 : vector<16x32xf32>
    %51 = arith.maximumf %48, %50 : vector<16x32xf32>
    %cst_37 = arith.constant 0.000000e+00 : f32
    %52 = vector.broadcast %cst_37 : f32 to vector<16x2xf32>
    %c0_38 = arith.constant 0 : index
    %c0_39 = arith.constant 0 : index
    %53 = vector.load %arg17[%c0_38, %c0_39] : memref<16x38xf32, #tpu.memory_space<vmem>>, vector<16x2xf32>
    tpu.vector_store %arg17[%c0_38, %c0_39], %52 {strides = array<i32>} : memref<16x38xf32, #tpu.memory_space<vmem>>, vector<16x2xf32>,
    %cst_40 = arith.constant 0.000000e+00 : f32
    %54 = vector.broadcast %cst_40 : f32 to vector<16x3xf32>
    %c0_41 = arith.constant 0 : index
    %c34 = arith.constant 34 : index
    %55 = vector.load %arg17[%c0_41, %c34] : memref<16x38xf32, #tpu.memory_space<vmem>>, vector<16x3xf32>
    tpu.vector_store %arg17[%c0_41, %c34], %54 {strides = array<i32>} : memref<16x38xf32, #tpu.memory_space<vmem>>, vector<16x3xf32>,
    %c0_42 = arith.constant 0 : index
    %c2_43 = arith.constant 2 : index
    %56 = vector.load %arg17[%c0_42, %c2_43] : memref<16x38xf32, #tpu.memory_space<vmem>>, vector<16x32xf32>
    tpu.vector_store %arg17[%c0_42, %c2_43], %51 {strides = array<i32>} : memref<16x38xf32, #tpu.memory_space<vmem>>, vector<16x32xf32>,
    %c0_44 = arith.constant 0 : index
    %c0_45 = arith.constant 0 : index
    %57 = vector.load %arg17[%c0_44, %c0_45] : memref<16x38xf32, #tpu.memory_space<vmem>>, vector<16x32xf32>
    %c0_46 = arith.constant 0 : index
    %c1_47 = arith.constant 1 : index
    %58 = vector.load %arg17[%c0_46, %c1_47] : memref<16x38xf32, #tpu.memory_space<vmem>>, vector<16x32xf32>
    %c0_48 = arith.constant 0 : index
    %c2_49 = arith.constant 2 : index
    %59 = vector.load %arg17[%c0_48, %c2_49] : memref<16x38xf32, #tpu.memory_space<vmem>>, vector<16x32xf32>
    %c0_50 = arith.constant 0 : index
    %c3_51 = arith.constant 3 : index
    %60 = vector.load %arg17[%c0_50, %c3_51] : memref<16x38xf32, #tpu.memory_space<vmem>>, vector<16x32xf32>
    %c0_52 = arith.constant 0 : index
    %c4_53 = arith.constant 4 : index
    %61 = vector.load %arg17[%c0_52, %c4_53] : memref<16x38xf32, #tpu.memory_space<vmem>>, vector<16x32xf32>
    %c0_54 = arith.constant 0 : index
    %c5_55 = arith.constant 5 : index
    %62 = vector.load %arg17[%c0_54, %c5_55] : memref<16x38xf32, #tpu.memory_space<vmem>>, vector<16x32xf32>
    %63 = tpu.concatenate %57, %58, %59, %60, %61, %62 in 0 : vector<16x32xf32>, vector<16x32xf32>, vector<16x32xf32>, vector<16x32xf32>, vector<16x32xf32>, vector<16x32xf32> -> vector<96x32xf32>
    %c0_56 = arith.constant 0 : index
    %c0_57 = arith.constant 0 : index
    %64 = vector.load %arg8[%c0_56, %c0_57] : memref<16x96xf32, #tpu.memory_space<vmem>>, vector<16x96xf32>
    %cst_58 = arith.constant dense<0.000000e+00> : vector<16x32xf32>
    %65 = tpu.matmul %64, %63, %cst_58 {dimension_numbers = #tpu.dot_dimension_numbers<[1], [0], [0], [1], [0, 0, 1, 1], [], []>} : vector<16x96xf32>, vector<96x32xf32>, vector<16x32xf32> -> vector<16x32xf32>
    %c0_59 = arith.constant 0 : index
    %c0_60 = arith.constant 0 : index
    %66 = vector.load %arg9[%c0_59, %c0_60] : memref<16x1xf32, #tpu.memory_space<vmem>>, vector<16x1xf32>
    %67 = vector.broadcast %66 : vector<16x1xf32> to vector<16x32xf32>
    %68 = arith.addf %65, %67 : vector<16x32xf32>
    %69 = vector.shape_cast %68 : vector<16x32xf32> to vector<1x16x32xf32>
    %cst_61 = arith.constant dense<0.000000e+00> : vector<1xf32>
    %70 = vector.multi_reduction <add>, %69, %cst_61 [1, 2] : vector<1x16x32xf32> to vector<1xf32>
    %71 = vector.shape_cast %70 : vector<1xf32> to vector<1x1x1xf32>
    %72 = vector.extract %71[0, 0, 0] : f32 from vector<1x1x1xf32>
    %73 = arith.mulf %68, %68 : vector<16x32xf32>
    %74 = vector.shape_cast %73 : vector<16x32xf32> to vector<1x16x32xf32>
    %cst_62 = arith.constant dense<0.000000e+00> : vector<1xf32>
    %75 = vector.multi_reduction <add>, %74, %cst_62 [1, 2] : vector<1x16x32xf32> to vector<1xf32>
    %76 = vector.shape_cast %75 : vector<1xf32> to vector<1x1x1xf32>
    %77 = vector.extract %76[0, 0, 0] : f32 from vector<1x1x1xf32>
    %cst_63 = arith.constant 5.120000e+02 : f32
    %78 = arith.divf %72, %cst_63 : f32
    %cst_64 = arith.constant 5.120000e+02 : f32
    %79 = arith.divf %77, %cst_64 : f32
    %80 = arith.mulf %78, %78 : f32
    %81 = arith.subf %79, %80 : f32
    %cst_65 = arith.constant 0.000000e+00 : f32
    %82 = arith.maximumf %81, %cst_65 : f32
    %83 = vector.broadcast %78 : f32 to vector<16x32xf32>
    %84 = arith.subf %68, %83 : vector<16x32xf32>
    %cst_66 = arith.constant 9.99999974E-6 : f32
    %85 = arith.addf %82, %cst_66 : f32
    %86 = math.rsqrt %85 : f32
    %87 = vector.broadcast %86 : f32 to vector<16x32xf32>
    %88 = arith.mulf %84, %87 : vector<16x32xf32>
    %c0_67 = arith.constant 0 : index
    %c0_68 = arith.constant 0 : index
    %89 = vector.load %arg10[%c0_67, %c0_68] : memref<16x32xf32, #tpu.memory_space<vmem>>, vector<16x32xf32>
    %90 = arith.mulf %88, %89 : vector<16x32xf32>
    %c0_69 = arith.constant 0 : index
    %c0_70 = arith.constant 0 : index
    %91 = vector.load %arg11[%c0_69, %c0_70] : memref<16x32xf32, #tpu.memory_space<vmem>>, vector<16x32xf32>
    %92 = arith.addf %90, %91 : vector<16x32xf32>
    %cst_71 = arith.constant 0.00999999977 : f32
    %93 = vector.broadcast %cst_71 : f32 to vector<16x32xf32>
    %94 = arith.mulf %93, %92 : vector<16x32xf32>
    %95 = arith.maximumf %92, %94 : vector<16x32xf32>
    %cst_72 = arith.constant 0.000000e+00 : f32
    %96 = vector.broadcast %cst_72 : f32 to vector<16x2xf32>
    %c0_73 = arith.constant 0 : index
    %c0_74 = arith.constant 0 : index
    %97 = vector.load %arg17[%c0_73, %c0_74] : memref<16x38xf32, #tpu.memory_space<vmem>>, vector<16x2xf32>
    tpu.vector_store %arg17[%c0_73, %c0_74], %96 {strides = array<i32>} : memref<16x38xf32, #tpu.memory_space<vmem>>, vector<16x2xf32>,
    %cst_75 = arith.constant 0.000000e+00 : f32
    %98 = vector.broadcast %cst_75 : f32 to vector<16x2xf32>
    %c0_76 = arith.constant 0 : index
    %c34_77 = arith.constant 34 : index
    %99 = vector.load %arg17[%c0_76, %c34_77] : memref<16x38xf32, #tpu.memory_space<vmem>>, vector<16x2xf32>
    tpu.vector_store %arg17[%c0_76, %c34_77], %98 {strides = array<i32>} : memref<16x38xf32, #tpu.memory_space<vmem>>, vector<16x2xf32>,
    %c0_78 = arith.constant 0 : index
    %c2_79 = arith.constant 2 : index
    %100 = vector.load %arg17[%c0_78, %c2_79] : memref<16x38xf32, #tpu.memory_space<vmem>>, vector<16x32xf32>
    tpu.vector_store %arg17[%c0_78, %c2_79], %95 {strides = array<i32>} : memref<16x38xf32, #tpu.memory_space<vmem>>, vector<16x32xf32>,
    %c0_80 = arith.constant 0 : index
    %c0_81 = arith.constant 0 : index
    %101 = vector.load %arg17[%c0_80, %c0_81] : memref<16x38xf32, #tpu.memory_space<vmem>>, vector<16x32xf32>
    %c0_82 = arith.constant 0 : index
    %c1_83 = arith.constant 1 : index
    %102 = vector.load %arg17[%c0_82, %c1_83] : memref<16x38xf32, #tpu.memory_space<vmem>>, vector<16x32xf32>
    %c0_84 = arith.constant 0 : index
    %c2_85 = arith.constant 2 : index
    %103 = vector.load %arg17[%c0_84, %c2_85] : memref<16x38xf32, #tpu.memory_space<vmem>>, vector<16x32xf32>
    %c0_86 = arith.constant 0 : index
    %c3_87 = arith.constant 3 : index
    %104 = vector.load %arg17[%c0_86, %c3_87] : memref<16x38xf32, #tpu.memory_space<vmem>>, vector<16x32xf32>
    %c0_88 = arith.constant 0 : index
    %c4_89 = arith.constant 4 : index
    %105 = vector.load %arg17[%c0_88, %c4_89] : memref<16x38xf32, #tpu.memory_space<vmem>>, vector<16x32xf32>
    %106 = tpu.concatenate %101, %102, %103, %104, %105 in 0 : vector<16x32xf32>, vector<16x32xf32>, vector<16x32xf32>, vector<16x32xf32>, vector<16x32xf32> -> vector<80x32xf32>
    %c0_90 = arith.constant 0 : index
    %c0_91 = arith.constant 0 : index
    %107 = vector.load %arg12[%c0_90, %c0_91] : memref<8x80xf32, #tpu.memory_space<vmem>>, vector<8x80xf32>
    %cst_92 = arith.constant dense<0.000000e+00> : vector<8x32xf32>
    %108 = tpu.matmul %107, %106, %cst_92 {dimension_numbers = #tpu.dot_dimension_numbers<[1], [0], [0], [1], [0, 0, 1, 1], [], []>} : vector<8x80xf32>, vector<80x32xf32>, vector<8x32xf32> -> vector<8x32xf32>
    %c0_93 = arith.constant 0 : index
    %c0_94 = arith.constant 0 : index
    %109 = vector.load %arg13[%c0_93, %c0_94] : memref<8x1xf32, #tpu.memory_space<vmem>>, vector<8x1xf32>
    %110 = vector.broadcast %109 : vector<8x1xf32> to vector<8x32xf32>
    %111 = arith.addf %108, %110 : vector<8x32xf32>
    %112 = vector.shape_cast %111 : vector<8x32xf32> to vector<1x8x32xf32>
    %cst_95 = arith.constant dense<0.000000e+00> : vector<1xf32>
    %113 = vector.multi_reduction <add>, %112, %cst_95 [1, 2] : vector<1x8x32xf32> to vector<1xf32>
    %114 = vector.shape_cast %113 : vector<1xf32> to vector<1x1x1xf32>
    %115 = vector.extract %114[0, 0, 0] : f32 from vector<1x1x1xf32>
    %116 = arith.mulf %111, %111 : vector<8x32xf32>
    %117 = vector.shape_cast %116 : vector<8x32xf32> to vector<1x8x32xf32>
    %cst_96 = arith.constant dense<0.000000e+00> : vector<1xf32>
    %118 = vector.multi_reduction <add>, %117, %cst_96 [1, 2] : vector<1x8x32xf32> to vector<1xf32>
    %119 = vector.shape_cast %118 : vector<1xf32> to vector<1x1x1xf32>
    %120 = vector.extract %119[0, 0, 0] : f32 from vector<1x1x1xf32>
    %cst_97 = arith.constant 2.560000e+02 : f32
    %121 = arith.divf %115, %cst_97 : f32
    %cst_98 = arith.constant 2.560000e+02 : f32
    %122 = arith.divf %120, %cst_98 : f32
    %123 = arith.mulf %121, %121 : f32
    %124 = arith.subf %122, %123 : f32
    %cst_99 = arith.constant 0.000000e+00 : f32
    %125 = arith.maximumf %124, %cst_99 : f32
    %126 = vector.broadcast %121 : f32 to vector<8x32xf32>
    %127 = arith.subf %111, %126 : vector<8x32xf32>
    %cst_100 = arith.constant 9.99999974E-6 : f32
    %128 = arith.addf %125, %cst_100 : f32
    %129 = math.rsqrt %128 : f32
    %130 = vector.broadcast %129 : f32 to vector<8x32xf32>
    %131 = arith.mulf %127, %130 : vector<8x32xf32>
    %c0_101 = arith.constant 0 : index
    %c0_102 = arith.constant 0 : index
    %132 = vector.load %arg14[%c0_101, %c0_102] : memref<8x32xf32, #tpu.memory_space<vmem>>, vector<8x32xf32>
    %133 = arith.mulf %131, %132 : vector<8x32xf32>
    %c0_103 = arith.constant 0 : index
    %c0_104 = arith.constant 0 : index
    %134 = vector.load %arg15[%c0_103, %c0_104] : memref<8x32xf32, #tpu.memory_space<vmem>>, vector<8x32xf32>
    %135 = arith.addf %133, %134 : vector<8x32xf32>
    %cst_105 = arith.constant 0.00999999977 : f32
    %136 = vector.broadcast %cst_105 : f32 to vector<8x32xf32>
    %137 = arith.mulf %136, %135 : vector<8x32xf32>
    %138 = arith.maximumf %135, %137 : vector<8x32xf32>
    %c0_106 = arith.constant 0 : index
    %c0_107 = arith.constant 0 : index
    %c0_108 = arith.constant 0 : index
    %139 = vector.load %arg16[%c0_106, %c0_107, %c0_108] : memref<1x8x32xf32, #tpu.memory_space<vmem>>, vector<1x8x32xf32>
    %140 = vector.shape_cast %139 : vector<1x8x32xf32> to vector<8x32xf32>
    %141 = vector.shape_cast %138 : vector<8x32xf32> to vector<1x8x32xf32>
    tpu.vector_store %arg16[%c0_106, %c0_107, %c0_108], %141 {strides = array<i32>} : memref<1x8x32xf32, #tpu.memory_space<vmem>>, vector<1x8x32xf32>,
    return
  }
  func.func @transform_0(%arg0: i32) -> (i32, i32, i32) {
    %c0_i32 = arith.constant 0 : i32
    %c0_i32_0 = arith.constant 0 : i32
    %c0_i32_1 = arith.constant 0 : i32
    return %arg0, %c0_i32, %c0_i32_0 : i32, i32, i32
  }
  func.func @transform_1(%arg0: i32) -> (i32, i32) {
    %c0_i32 = arith.constant 0 : i32
    %c0_i32_0 = arith.constant 0 : i32
    %c0_i32_1 = arith.constant 0 : i32
    return %c0_i32, %c0_i32_0 : i32, i32
  }
  func.func @transform_2(%arg0: i32) -> (i32, i32) {
    %c0_i32 = arith.constant 0 : i32
    %c0_i32_0 = arith.constant 0 : i32
    %c0_i32_1 = arith.constant 0 : i32
    return %c0_i32, %c0_i32_0 : i32, i32
  }
  func.func @transform_3(%arg0: i32) -> (i32, i32) {
    %c0_i32 = arith.constant 0 : i32
    %c0_i32_0 = arith.constant 0 : i32
    %c0_i32_1 = arith.constant 0 : i32
    return %c0_i32, %c0_i32_0 : i32, i32
  }
  func.func @transform_4(%arg0: i32) -> (i32, i32) {
    %c0_i32 = arith.constant 0 : i32
    %c0_i32_0 = arith.constant 0 : i32
    %c0_i32_1 = arith.constant 0 : i32
    return %c0_i32, %c0_i32_0 : i32, i32
  }
  func.func @transform_5(%arg0: i32) -> (i32, i32) {
    %c0_i32 = arith.constant 0 : i32
    %c0_i32_0 = arith.constant 0 : i32
    %c0_i32_1 = arith.constant 0 : i32
    return %c0_i32, %c0_i32_0 : i32, i32
  }
  func.func @transform_6(%arg0: i32) -> (i32, i32) {
    %c0_i32 = arith.constant 0 : i32
    %c0_i32_0 = arith.constant 0 : i32
    %c0_i32_1 = arith.constant 0 : i32
    return %c0_i32, %c0_i32_0 : i32, i32
  }
  func.func @transform_7(%arg0: i32) -> (i32, i32) {
    %c0_i32 = arith.constant 0 : i32
    %c0_i32_0 = arith.constant 0 : i32
    %c0_i32_1 = arith.constant 0 : i32
    return %c0_i32, %c0_i32_0 : i32, i32
  }
  func.func @transform_8(%arg0: i32) -> (i32, i32) {
    %c0_i32 = arith.constant 0 : i32
    %c0_i32_0 = arith.constant 0 : i32
    %c0_i32_1 = arith.constant 0 : i32
    return %c0_i32, %c0_i32_0 : i32, i32
  }
  func.func @transform_9(%arg0: i32) -> (i32, i32) {
    %c0_i32 = arith.constant 0 : i32
    %c0_i32_0 = arith.constant 0 : i32
    %c0_i32_1 = arith.constant 0 : i32
    return %c0_i32, %c0_i32_0 : i32, i32
  }
  func.func @transform_10(%arg0: i32) -> (i32, i32) {
    %c0_i32 = arith.constant 0 : i32
    %c0_i32_0 = arith.constant 0 : i32
    %c0_i32_1 = arith.constant 0 : i32
    return %c0_i32, %c0_i32_0 : i32, i32
  }
  func.func @transform_11(%arg0: i32) -> (i32, i32) {
    %c0_i32 = arith.constant 0 : i32
    %c0_i32_0 = arith.constant 0 : i32
    %c0_i32_1 = arith.constant 0 : i32
    return %c0_i32, %c0_i32_0 : i32, i32
  }
  func.func @transform_12(%arg0: i32) -> (i32, i32) {
    %c0_i32 = arith.constant 0 : i32
    %c0_i32_0 = arith.constant 0 : i32
    %c0_i32_1 = arith.constant 0 : i32
    return %c0_i32, %c0_i32_0 : i32, i32
  }
  func.func @transform_13(%arg0: i32) -> (i32, i32) {
    %c0_i32 = arith.constant 0 : i32
    %c0_i32_0 = arith.constant 0 : i32
    %c0_i32_1 = arith.constant 0 : i32
    return %c0_i32, %c0_i32_0 : i32, i32
  }
  func.func @transform_14(%arg0: i32) -> (i32, i32) {
    %c0_i32 = arith.constant 0 : i32
    %c0_i32_0 = arith.constant 0 : i32
    %c0_i32_1 = arith.constant 0 : i32
    return %c0_i32, %c0_i32_0 : i32, i32
  }
  func.func @transform_15(%arg0: i32) -> (i32, i32, i32) {
    %c0_i32 = arith.constant 0 : i32
    %c0_i32_0 = arith.constant 0 : i32
    %c0_i32_1 = arith.constant 0 : i32
    return %arg0, %c0_i32, %c0_i32_0 : i32, i32, i32
  }
}

</mosaic_0001>

<llo_original>
// kernel: tpu_custom_call.1
$region0: #{tpu_custom_call.1}
  #allocation0 [shape = 'u32[]', space=smem, size = 0x4, offset = 0x4, fixed_abs, tag = 'smem constant byte address 0x4 - core index']
  #allocation1 [shape = 'u32[144,128]{1,0:T(1,128)}', space=vmem, size = 0x12000, scoped, tag = 'internal scratch']
  #allocation2 [shape = 'f32[16,38]{1,0:T(8,128)}', space=vmem, size = 0x2000, scoped, tag = 'scratch operand']
  %s0 = inlined_call_operand.vmem [shape: f32[2,8,32], index: 0, kind: input, shape index: {}]
  %s1 = inlined_call_operand.hbm [shape: f32[8,8], index: 1, kind: input, shape index: {}]
  %s2 = inlined_call_operand.vmem [shape: f32[8,1], index: 2, kind: input, shape index: {}]
  %s3 = inlined_call_operand.vmem [shape: f32[16,56], index: 3, kind: input, shape index: {}]
  %s4 = inlined_call_operand.vmem [shape: f32[16,1], index: 4, kind: input, shape index: {}]
  %s5 = inlined_call_operand.vmem [shape: f32[16,32], index: 5, kind: input, shape index: {}]
  %s6 = inlined_call_operand.hbm [shape: f32[16,32], index: 6, kind: input, shape index: {}]
  %s7 = inlined_call_operand.vmem [shape: f32[16,96], index: 7, kind: input, shape index: {}]
  %s8 = inlined_call_operand.vmem [shape: f32[16,1], index: 8, kind: input, shape index: {}]
  %s9 = inlined_call_operand.hbm [shape: f32[16,32], index: 9, kind: input, shape index: {}]
  %s10 = inlined_call_operand.hbm [shape: f32[16,32], index: 10, kind: input, shape index: {}]
  %s11 = inlined_call_operand.vmem [shape: f32[8,80], index: 11, kind: input, shape index: {}]
  %s12 = inlined_call_operand.vmem [shape: f32[8,1], index: 12, kind: input, shape index: {}]
  %s13 = inlined_call_operand.hbm [shape: f32[8,32], index: 13, kind: input, shape index: {}]
  %s14 = inlined_call_operand.hbm [shape: f32[8,32], index: 14, kind: input, shape index: {}]
  %s15 = inlined_call_operand.hbm [shape: f32[2,8,32], index: 15, kind: output, shape index: {}]
  %s16 = sld [smem:[#allocation0]]
  $region117: #{tpu_custom_call.1} parent=0
    _
  %s18 = ssub.s32 1, %s16
  %s19 = scalar_select 0, %s18, %s16
  $region1: #{tpu_custom_call.1} parent=0
    #allocation3 [shape = 'u8[4096]{0}', space=vmem, size = 0x1000, scoped, tag = 'input window, operand 1, single buffered']
    #allocation4 [shape = 's32[2]{0}', space=sflag, size = 0x8, scoped, tag = 'scoped memory for tpu_custom_call.1']
    #allocation5 [shape = 's32[2]{0}', space=sflag, size = 0x8, scoped, tag = 'scoped memory for tpu_custom_call.1']
    #allocation6 [shape = 'u8[8192]{0}', space=vmem, size = 0x2000, scoped, tag = 'input window, operand 6, single buffered']
    #allocation7 [shape = 's32[1]{0}', space=sflag, size = 0x4, scoped, tag = 'scoped memory for tpu_custom_call.1']
    #allocation8 [shape = 'u8[8192]{0}', space=vmem, size = 0x2000, scoped, tag = 'input window, operand 9, single buffered']
    #allocation9 [shape = 'u8[8192]{0}', space=vmem, size = 0x2000, scoped, tag = 'input window, operand 10, single buffered']
    #allocation10 [shape = 's32[1]{0}', space=sflag, size = 0x4, scoped, tag = 'scoped memory for tpu_custom_call.1']
    #allocation11 [shape = 'u8[4096]{0}', space=vmem, size = 0x1000, scoped, tag = 'input window, operand 13, single buffered']
    #allocation12 [shape = 'u8[4096]{0}', space=vmem, size = 0x1000, scoped, tag = 'input window, operand 14, single buffered']
    #allocation13 [shape = 's32[1]{0}', space=sflag, size = 0x4, scoped, tag = 'scoped memory for tpu_custom_call.1']
    #allocation14 [shape = 'u8[8192]{0}', space=vmem, size = 0x2000, scoped, tag = 'output window, operand 0']
    %20 = vsyncpa [#allocation4], 0
    %21 = vsyncpa [#allocation7], 0
    %22 = vsyncpa [#allocation10], 0
    %23 = vsyncpa [#allocation13], 0
    %24 = vsyncpa [#allocation5], 0
    %s25 = scalar_lea.sflag [#allocation5], 1
    %26 = vsyncpa %s25, 0
    loop: start=0, step=1, limit=4
    $region2: #{tpu_custom_call.1} parent=1 // loop_pre_header
      _
    $region3: #{tpu_custom_call.1} parent=1 // loop_header
      %s28 = sphi 0, %s32
      %p29 = scmp.ge.s32.totalorder %s28, 4
      %s38 = sphi 0, %s40
      %s41 = sphi 0, %s38
      %s42 = sphi 0, %s41
      %s58 = sphi 0, %s42
      %s62 = sphi 0, %s62
      %s64 = sphi 0, %s62
      %s65 = sphi 0, %s64
      %s79 = sphi 0, %s65
      %s83 = sphi 0, %s83
      %s85 = sphi 0, %s83
      %s86 = sphi 0, %s85
      %s100 = sphi 0, %s86
      %s104 = sphi 0, %s104
      %s106 = sphi 0, %s104
      %s107 = sphi 0, %s106
      %s121 = sphi 0, %s107
      %s125 = sphi 0, %s125
      %s127 = sphi 0, %s125
      %s128 = sphi 0, %s127
      %s142 = sphi 0, %s128
      %s146 = sphi 0, %s146
      %s148 = sphi 0, %s146
      %s149 = sphi 0, %s148
      %s163 = sphi 0, %s149
      %s167 = sphi 0, %s167
      %s169 = sphi 0, %s167
      %s170 = sphi 0, %s169
      %s184 = sphi 0, %s170
      %s188 = sphi 0, %s188
      %s190 = sphi 0, %s188
      %s191 = sphi 0, %s190
      %s205 = sphi 0, %s191
      %s209 = sphi 0, %s209
      %s211 = sphi 0, %s209
      %s212 = sphi 0, %s211
      %s226 = sphi 0, %s212
      %s230 = sphi 0, %s230
      %s232 = sphi 0, %s230
      %s233 = sphi 0, %s232
      %s247 = sphi 0, %s233
      %s251 = sphi 0, %s251
      %s253 = sphi 0, %s251
      %s254 = sphi 0, %s253
      %s268 = sphi 0, %s254
      %s272 = sphi 0, %s272
      %s274 = sphi 0, %s272
      %s275 = sphi 0, %s274
      %s289 = sphi 0, %s275
      %s293 = sphi 0, %s293
      %s295 = sphi 0, %s293
      %s296 = sphi 0, %s295
      %s310 = sphi 0, %s296
      %s314 = sphi 0, %s314
      %s316 = sphi 0, %s314
      %s317 = sphi 0, %s316
      %s331 = sphi 0, %s317
      %s335 = sphi 0, %s335
      %s337 = sphi 0, %s335
      %s338 = sphi 0, %s337
      %s352 = sphi 0, %s338
      %s358 = sphi 0, %s360
      %s361 = sphi 0, %s358
      %s362 = sphi 0, %s361
      %s378 = sphi 0, %s362
    $region4: #{tpu_custom_call.1} parent=1 // loop_header_branch
      %31 = sbr.rel (%p29) target = $region8
    $region5: #{tpu_custom_call.1} parent=1 // loop_body
      %s33 = ssub.s32 %s28, 1
      %s34 = ssub.s32 %s28, 2
      %s35 = sadd.s32 %s28, 1
      %s36 = ssub.s32 %s28, %s35
      %p37 = scmp.eq.s32.totalorder %s36, 0
      %s39 = sadd.s32 %s38, 1
      %s40 = scalar_select %p37, %s38, %s39
      %p43 = pneg %p37
      %p44 = scmp.eq.s32.totalorder %s28, 1
      %p45 = por %p43, %p44
      %p46 = scmp.ne.s32.totalorder %s38, %s41
      %p47 = scmp.eq.s32.totalorder %s28, 0
      %p48 = por %p46, %p47
      %p49 = scmp.ne.s32.totalorder %s38, %s41
      %p50 = scmp.eq.s32.totalorder %s33, 1
      %p51 = por %p49, %p50
      %p52 = scmp.ne.s32.totalorder %s41, %s42
      %p53 = scmp.eq.s32.totalorder %s33, 0
      %p54 = por %p52, %p53
      %p55 = scmp.ne.s32.totalorder %s41, %s42
      %p56 = scmp.eq.s32.totalorder %s34, 1
      %p57 = por %p55, %p56
      %p59 = scmp.ne.s32.totalorder %s42, %s58
      %p60 = scmp.eq.s32.totalorder %s34, 0
      %p61 = por %p59, %p60
      %s63 = sadd.s32 %s62, 1
      %p66 = scmp.eq.s32.totalorder %s28, 1
      %p67 = scmp.ne.s32.totalorder %s62, %s64
      %p68 = scmp.eq.s32.totalorder %s28, 0
      %p69 = por %p67, %p68
      %p70 = scmp.ne.s32.totalorder %s62, %s64
      %p71 = scmp.eq.s32.totalorder %s33, 1
      %p72 = por %p70, %p71
      %p73 = scmp.ne.s32.totalorder %s64, %s65
      %p74 = scmp.eq.s32.totalorder %s33, 0
      %p75 = por %p73, %p74
      %p76 = scmp.ne.s32.totalorder %s64, %s65
      %p77 = scmp.eq.s32.totalorder %s34, 1
      %p78 = por %p76, %p77
      %p80 = scmp.ne.s32.totalorder %s65, %s79
      %p81 = scmp.eq.s32.totalorder %s34, 0
      %p82 = por %p80, %p81
      %s84 = sadd.s32 %s83, 1
      %p87 = scmp.eq.s32.totalorder %s28, 1
      %p88 = scmp.ne.s32.totalorder %s83, %s85
      %p89 = scmp.eq.s32.totalorder %s28, 0
      %p90 = por %p88, %p89
      %p91 = scmp.ne.s32.totalorder %s83, %s85
      %p92 = scmp.eq.s32.totalorder %s33, 1
      %p93 = por %p91, %p92
      %p94 = scmp.ne.s32.totalorder %s85, %s86
      %p95 = scmp.eq.s32.totalorder %s33, 0
      %p96 = por %p94, %p95
      %p97 = scmp.ne.s32.totalorder %s85, %s86
      %p98 = scmp.eq.s32.totalorder %s34, 1
      %p99 = por %p97, %p98
      %p101 = scmp.ne.s32.totalorder %s86, %s100
      %p102 = scmp.eq.s32.totalorder %s34, 0
      %p103 = por %p101, %p102
      %s105 = sadd.s32 %s104, 1
      %p108 = scmp.eq.s32.totalorder %s28, 1
      %p109 = scmp.ne.s32.totalorder %s104, %s106
      %p110 = scmp.eq.s32.totalorder %s28, 0
      %p111 = por %p109, %p110
      %p112 = scmp.ne.s32.totalorder %s104, %s106
      %p113 = scmp.eq.s32.totalorder %s33, 1
      %p114 = por %p112, %p113
      %p115 = scmp.ne.s32.totalorder %s106, %s107
      %p116 = scmp.eq.s32.totalorder %s33, 0
      %p117 = por %p115, %p116
      %p118 = scmp.ne.s32.totalorder %s106, %s107
      %p119 = scmp.eq.s32.totalorder %s34, 1
      %p120 = por %p118, %p119
      %p122 = scmp.ne.s32.totalorder %s107, %s121
      %p123 = scmp.eq.s32.totalorder %s34, 0
      %p124 = por %p122, %p123
      %s126 = sadd.s32 %s125, 1
      %p129 = scmp.eq.s32.totalorder %s28, 1
      %p130 = scmp.ne.s32.totalorder %s125, %s127
      %p131 = scmp.eq.s32.totalorder %s28, 0
      %p132 = por %p130, %p131
      %p133 = scmp.ne.s32.totalorder %s125, %s127
      %p134 = scmp.eq.s32.totalorder %s33, 1
      %p135 = por %p133, %p134
      %p136 = scmp.ne.s32.totalorder %s127, %s128
      %p137 = scmp.eq.s32.totalorder %s33, 0
      %p138 = por %p136, %p137
      %p139 = scmp.ne.s32.totalorder %s127, %s128
      %p140 = scmp.eq.s32.totalorder %s34, 1
      %p141 = por %p139, %p140
      %p143 = scmp.ne.s32.totalorder %s128, %s142
      %p144 = scmp.eq.s32.totalorder %s34, 0
      %p145 = por %p143, %p144
      %s147 = sadd.s32 %s146, 1
      %p150 = scmp.eq.s32.totalorder %s28, 1
      %p151 = scmp.ne.s32.totalorder %s146, %s148
      %p152 = scmp.eq.s32.totalorder %s28, 0
      %p153 = por %p151, %p152
      %p154 = scmp.ne.s32.totalorder %s146, %s148
      %p155 = scmp.eq.s32.totalorder %s33, 1
      %p156 = por %p154, %p155
      %p157 = scmp.ne.s32.totalorder %s148, %s149
      %p158 = scmp.eq.s32.totalorder %s33, 0
      %p159 = por %p157, %p158
      %p160 = scmp.ne.s32.totalorder %s148, %s149
      %p161 = scmp.eq.s32.totalorder %s34, 1
      %p162 = por %p160, %p161
      %p164 = scmp.ne.s32.totalorder %s149, %s163
      %p165 = scmp.eq.s32.totalorder %s34, 0
      %p166 = por %p164, %p165
      %s168 = sadd.s32 %s167, 1
      %p171 = scmp.eq.s32.totalorder %s28, 1
      %p172 = scmp.ne.s32.totalorder %s167, %s169
      %p173 = scmp.eq.s32.totalorder %s28, 0
      %p174 = por %p172, %p173
      %p175 = scmp.ne.s32.totalorder %s167, %s169
      %p176 = scmp.eq.s32.totalorder %s33, 1
      %p177 = por %p175, %p176
      %p178 = scmp.ne.s32.totalorder %s169, %s170
      %p179 = scmp.eq.s32.totalorder %s33, 0
      %p180 = por %p178, %p179
      %p181 = scmp.ne.s32.totalorder %s169, %s170
      %p182 = scmp.eq.s32.totalorder %s34, 1
      %p183 = por %p181, %p182
      %p185 = scmp.ne.s32.totalorder %s170, %s184
      %p186 = scmp.eq.s32.totalorder %s34, 0
      %p187 = por %p185, %p186
      %s189 = sadd.s32 %s188, 1
      %p192 = scmp.eq.s32.totalorder %s28, 1
      %p193 = scmp.ne.s32.totalorder %s188, %s190
      %p194 = scmp.eq.s32.totalorder %s28, 0
      %p195 = por %p193, %p194
      %p196 = scmp.ne.s32.totalorder %s188, %s190
      %p197 = scmp.eq.s32.totalorder %s33, 1
      %p198 = por %p196, %p197
      %p199 = scmp.ne.s32.totalorder %s190, %s191
      %p200 = scmp.eq.s32.totalorder %s33, 0
      %p201 = por %p199, %p200
      %p202 = scmp.ne.s32.totalorder %s190, %s191
      %p203 = scmp.eq.s32.totalorder %s34, 1
      %p204 = por %p202, %p203
      %p206 = scmp.ne.s32.totalorder %s191, %s205
      %p207 = scmp.eq.s32.totalorder %s34, 0
      %p208 = por %p206, %p207
      %s210 = sadd.s32 %s209, 1
      %p213 = scmp.eq.s32.totalorder %s28, 1
      %p214 = scmp.ne.s32.totalorder %s209, %s211
      %p215 = scmp.eq.s32.totalorder %s28, 0
      %p216 = por %p214, %p215
      %p217 = scmp.ne.s32.totalorder %s209, %s211
      %p218 = scmp.eq.s32.totalorder %s33, 1
      %p219 = por %p217, %p218
      %p220 = scmp.ne.s32.totalorder %s211, %s212
      %p221 = scmp.eq.s32.totalorder %s33, 0
      %p222 = por %p220, %p221
      %p223 = scmp.ne.s32.totalorder %s211, %s212
      %p224 = scmp.eq.s32.totalorder %s34, 1
      %p225 = por %p223, %p224
      %p227 = scmp.ne.s32.totalorder %s212, %s226
      %p228 = scmp.eq.s32.totalorder %s34, 0
      %p229 = por %p227, %p228
      %s231 = sadd.s32 %s230, 1
      %p234 = scmp.eq.s32.totalorder %s28, 1
      %p235 = scmp.ne.s32.totalorder %s230, %s232
      %p236 = scmp.eq.s32.totalorder %s28, 0
      %p237 = por %p235, %p236
      %p238 = scmp.ne.s32.totalorder %s230, %s232
      %p239 = scmp.eq.s32.totalorder %s33, 1
      %p240 = por %p238, %p239
      %p241 = scmp.ne.s32.totalorder %s232, %s233
      %p242 = scmp.eq.s32.totalorder %s33, 0
      %p243 = por %p241, %p242
      %p244 = scmp.ne.s32.totalorder %s232, %s233
      %p245 = scmp.eq.s32.totalorder %s34, 1
      %p246 = por %p244, %p245
      %p248 = scmp.ne.s32.totalorder %s233, %s247
      %p249 = scmp.eq.s32.totalorder %s34, 0
      %p250 = por %p248, %p249
      %s252 = sadd.s32 %s251, 1
      %p255 = scmp.eq.s32.totalorder %s28, 1
      %p256 = scmp.ne.s32.totalorder %s251, %s253
      %p257 = scmp.eq.s32.totalorder %s28, 0
      %p258 = por %p256, %p257
      %p259 = scmp.ne.s32.totalorder %s251, %s253
      %p260 = scmp.eq.s32.totalorder %s33, 1
      %p261 = por %p259, %p260
      %p262 = scmp.ne.s32.totalorder %s253, %s254
      %p263 = scmp.eq.s32.totalorder %s33, 0
      %p264 = por %p262, %p263
      %p265 = scmp.ne.s32.totalorder %s253, %s254
      %p266 = scmp.eq.s32.totalorder %s34, 1
      %p267 = por %p265, %p266
      %p269 = scmp.ne.s32.totalorder %s254, %s268
      %p270 = scmp.eq.s32.totalorder %s34, 0
      %p271 = por %p269, %p270
      %s273 = sadd.s32 %s272, 1
      %p276 = scmp.eq.s32.totalorder %s28, 1
      %p277 = scmp.ne.s32.totalorder %s272, %s274
      %p278 = scmp.eq.s32.totalorder %s28, 0
      %p279 = por %p277, %p278
      %p280 = scmp.ne.s32.totalorder %s272, %s274
      %p281 = scmp.eq.s32.totalorder %s33, 1
      %p282 = por %p280, %p281
      %p283 = scmp.ne.s32.totalorder %s274, %s275
      %p284 = scmp.eq.s32.totalorder %s33, 0
      %p285 = por %p283, %p284
      %p286 = scmp.ne.s32.totalorder %s274, %s275
      %p287 = scmp.eq.s32.totalorder %s34, 1
      %p288 = por %p286, %p287
      %p290 = scmp.ne.s32.totalorder %s275, %s289
      %p291 = scmp.eq.s32.totalorder %s34, 0
      %p292 = por %p290, %p291
      %s294 = sadd.s32 %s293, 1
      %p297 = scmp.eq.s32.totalorder %s28, 1
      %p298 = scmp.ne.s32.totalorder %s293, %s295
      %p299 = scmp.eq.s32.totalorder %s28, 0
      %p300 = por %p298, %p299
      %p301 = scmp.ne.s32.totalorder %s293, %s295
      %p302 = scmp.eq.s32.totalorder %s33, 1
      %p303 = por %p301, %p302
      %p304 = scmp.ne.s32.totalorder %s295, %s296
      %p305 = scmp.eq.s32.totalorder %s33, 0
      %p306 = por %p304, %p305
      %p307 = scmp.ne.s32.totalorder %s295, %s296
      %p308 = scmp.eq.s32.totalorder %s34, 1
      %p309 = por %p307, %p308
      %p311 = scmp.ne.s32.totalorder %s296, %s310
      %p312 = scmp.eq.s32.totalorder %s34, 0
      %p313 = por %p311, %p312
      %s315 = sadd.s32 %s314, 1
      %p318 = scmp.eq.s32.totalorder %s28, 1
      %p319 = scmp.ne.s32.totalorder %s314, %s316
      %p320 = scmp.eq.s32.totalorder %s28, 0
      %p321 = por %p319, %p320
      %p322 = scmp.ne.s32.totalorder %s314, %s316
      %p323 = scmp.eq.s32.totalorder %s33, 1
      %p324 = por %p322, %p323
      %p325 = scmp.ne.s32.totalorder %s316, %s317
      %p326 = scmp.eq.s32.totalorder %s33, 0
      %p327 = por %p325, %p326
      %p328 = scmp.ne.s32.totalorder %s316, %s317
      %p329 = scmp.eq.s32.totalorder %s34, 1
      %p330 = por %p328, %p329
      %p332 = scmp.ne.s32.totalorder %s317, %s331
      %p333 = scmp.eq.s32.totalorder %s34, 0
      %p334 = por %p332, %p333
      %s336 = sadd.s32 %s335, 1
      %p339 = scmp.eq.s32.totalorder %s28, 1
      %p340 = scmp.ne.s32.totalorder %s335, %s337
      %p341 = scmp.eq.s32.totalorder %s28, 0
      %p342 = por %p340, %p341
      %p343 = scmp.ne.s32.totalorder %s335, %s337
      %p344 = scmp.eq.s32.totalorder %s33, 1
      %p345 = por %p343, %p344
      %p346 = scmp.ne.s32.totalorder %s337, %s338
      %p347 = scmp.eq.s32.totalorder %s33, 0
      %p348 = por %p346, %p347
      %p349 = scmp.ne.s32.totalorder %s337, %s338
      %p350 = scmp.eq.s32.totalorder %s34, 1
      %p351 = por %p349, %p350
      %p353 = scmp.ne.s32.totalorder %s338, %s352
      %p354 = scmp.eq.s32.totalorder %s34, 0
      %p355 = por %p353, %p354
      %s356 = ssub.s32 %s28, %s35
      %p357 = scmp.eq.s32.totalorder %s356, 0
      %s359 = sadd.s32 %s358, 1
      %s360 = scalar_select %p357, %s358, %s359
      %p363 = pneg %p357
      %p364 = scmp.eq.s32.totalorder %s28, 1
      %p365 = por %p363, %p364
      %p366 = scmp.ne.s32.totalorder %s358, %s361
      %p367 = scmp.eq.s32.totalorder %s28, 0
      %p368 = por %p366, %p367
      %p369 = scmp.ne.s32.totalorder %s358, %s361
      %p370 = scmp.eq.s32.totalorder %s33, 1
      %p371 = por %p369, %p370
      %p372 = scmp.ne.s32.totalorder %s361, %s362
      %p373 = scmp.eq.s32.totalorder %s33, 0
      %p374 = por %p372, %p373
      %p375 = scmp.ne.s32.totalorder %s361, %s362
      %p376 = scmp.eq.s32.totalorder %s34, 1
      %p377 = por %p375, %p376
      %p379 = scmp.ne.s32.totalorder %s362, %s378
      %p380 = scmp.eq.s32.totalorder %s34, 0
      %p381 = por %p379, %p380
      %p382 = scmp.le.s32.totalorder 1, %s28
      %p383 = scmp.lt.s32.totalorder %s28, 3
      %p384 = pnand %p382, %p383
      %p385 = pneg %p384
      // Predicated region
      $region9: #{tpu_custom_call.1} parent=5 // pred_check
        _
      $region10: #{tpu_custom_call.1} parent=5 // pred_check_branch
        %387 = sbr.rel (%p384) target = $region12
      $region11: #{tpu_custom_call.1} parent=5 // pred_region
        %s388 = ssub.s32 %s28, 1
        // Predicated region
        $region13: #{tpu_custom_call.1} parent=11 // pred_check
          %p389 = pneg %p75
        $region14: #{tpu_custom_call.1} parent=11 // pred_check_branch
          %391 = sbr.rel (%p389) target = $region16
        $region15: #{tpu_custom_call.1} parent=11 // pred_region
          %s393 = ssub.s32 128, 128
          %394 = vsyncadd [#allocation4], %s393
          %s396 = sshll.u32 [#allocation3], 4
          %s397 = int_to_ptr.vmem [resolvable:$true] %s396
          %399 = dma.hbm_to_vmem [thread:$0]  %s1, 128, %s397, [#allocation4]
        $region16: #{tpu_custom_call.1} parent=11 // pred_fallthru
          _
        // Predicated region
        $region17: #{tpu_custom_call.1} parent=11 // pred_check
          %p400 = pneg %p96
        $region18: #{tpu_custom_call.1} parent=11 // pred_check_branch
          %402 = sbr.rel (%p400) target = $region20
        $region19: #{tpu_custom_call.1} parent=11 // pred_region
          _
        $region20: #{tpu_custom_call.1} parent=11 // pred_fallthru
          _
        // Predicated region
        $region21: #{tpu_custom_call.1} parent=11 // pred_check
          %p403 = pneg %p117
        $region22: #{tpu_custom_call.1} parent=11 // pred_check_branch
          %405 = sbr.rel (%p403) target = $region24
        $region23: #{tpu_custom_call.1} parent=11 // pred_region
          _
        $region24: #{tpu_custom_call.1} parent=11 // pred_fallthru
          _
        // Predicated region
        $region25: #{tpu_custom_call.1} parent=11 // pred_check
          %p406 = pneg %p138
        $region26: #{tpu_custom_call.1} parent=11 // pred_check_branch
          %408 = sbr.rel (%p406) target = $region28
        $region27: #{tpu_custom_call.1} parent=11 // pred_region
          _
        $region28: #{tpu_custom_call.1} parent=11 // pred_fallthru
          _
        // Predicated region
        $region29: #{tpu_custom_call.1} parent=11 // pred_check
          %p409 = pneg %p159
        $region30: #{tpu_custom_call.1} parent=11 // pred_check_branch
          %411 = sbr.rel (%p409) target = $region32
        $region31: #{tpu_custom_call.1} parent=11 // pred_region
          _
        $region32: #{tpu_custom_call.1} parent=11 // pred_fallthru
          _
        // Predicated region
        $region33: #{tpu_custom_call.1} parent=11 // pred_check
          %p412 = pneg %p180
        $region34: #{tpu_custom_call.1} parent=11 // pred_check_branch
          %414 = sbr.rel (%p412) target = $region36
        $region35: #{tpu_custom_call.1} parent=11 // pred_region
          %s416 = ssub.s32 256, 256
          %417 = vsyncadd [#allocation7], %s416
          %s418 = sshll.u32 [#allocation6], 4
          %s419 = int_to_ptr.vmem [resolvable:$true] %s418
          %424 = dma.hbm_to_vmem [thread:$0]  %s6, 256, %s419, [#allocation7], 128, 128, 8
        $region36: #{tpu_custom_call.1} parent=11 // pred_fallthru
          _
        // Predicated region
        $region37: #{tpu_custom_call.1} parent=11 // pred_check
          %p425 = pneg %p201
        $region38: #{tpu_custom_call.1} parent=11 // pred_check_branch
          %427 = sbr.rel (%p425) target = $region40
        $region39: #{tpu_custom_call.1} parent=11 // pred_region
          _
        $region40: #{tpu_custom_call.1} parent=11 // pred_fallthru
          _
        // Predicated region
        $region41: #{tpu_custom_call.1} parent=11 // pred_check
          %p428 = pneg %p222
        $region42: #{tpu_custom_call.1} parent=11 // pred_check_branch
          %430 = sbr.rel (%p428) target = $region44
        $region43: #{tpu_custom_call.1} parent=11 // pred_region
          _
        $region44: #{tpu_custom_call.1} parent=11 // pred_fallthru
          _
        // Predicated region
        $region45: #{tpu_custom_call.1} parent=11 // pred_check
          %p431 = pneg %p243
        $region46: #{tpu_custom_call.1} parent=11 // pred_check_branch
          %433 = sbr.rel (%p431) target = $region48
        $region47: #{tpu_custom_call.1} parent=11 // pred_region
          %s435 = ssub.s32 256, 256
          %436 = vsyncadd [#allocation7], %s435
          %s437 = sshll.u32 [#allocation8], 4
          %s438 = int_to_ptr.vmem [resolvable:$true] %s437
          %443 = dma.hbm_to_vmem [thread:$0]  %s9, 256, %s438, [#allocation7], 128, 128, 8
        $region48: #{tpu_custom_call.1} parent=11 // pred_fallthru
          _
        // Predicated region
        $region49: #{tpu_custom_call.1} parent=11 // pred_check
          %p444 = pneg %p264
        $region50: #{tpu_custom_call.1} parent=11 // pred_check_branch
          %446 = sbr.rel (%p444) target = $region52
        $region51: #{tpu_custom_call.1} parent=11 // pred_region
          %s448 = ssub.s32 256, 256
          %449 = vsyncadd [#allocation10], %s448
          %s450 = sshll.u32 [#allocation9], 4
          %s451 = int_to_ptr.vmem [resolvable:$true] %s450
          %456 = dma.hbm_to_vmem [thread:$0]  %s10, 256, %s451, [#allocation10], 128, 128, 8
        $region52: #{tpu_custom_call.1} parent=11 // pred_fallthru
          _
        // Predicated region
        $region53: #{tpu_custom_call.1} parent=11 // pred_check
          %p457 = pneg %p285
        $region54: #{tpu_custom_call.1} parent=11 // pred_check_branch
          %459 = sbr.rel (%p457) target = $region56
        $region55: #{tpu_custom_call.1} parent=11 // pred_region
          _
        $region56: #{tpu_custom_call.1} parent=11 // pred_fallthru
          _
        // Predicated region
        $region57: #{tpu_custom_call.1} parent=11 // pred_check
          %p460 = pneg %p306
        $region58: #{tpu_custom_call.1} parent=11 // pred_check_branch
          %462 = sbr.rel (%p460) target = $region60
        $region59: #{tpu_custom_call.1} parent=11 // pred_region
          _
        $region60: #{tpu_custom_call.1} parent=11 // pred_fallthru
          _
        // Predicated region
        $region61: #{tpu_custom_call.1} parent=11 // pred_check
          %p463 = pneg %p327
        $region62: #{tpu_custom_call.1} parent=11 // pred_check_branch
          %465 = sbr.rel (%p463) target = $region64
        $region63: #{tpu_custom_call.1} parent=11 // pred_region
          %s467 = ssub.s32 128, 128
          %468 = vsyncadd [#allocation10], %s467
          %s470 = sshll.u32 [#allocation11], 4
          %s471 = int_to_ptr.vmem [resolvable:$true] %s470
          %473 = dma.hbm_to_vmem [thread:$0]  %s13, 128, %s471, [#allocation10]
        $region64: #{tpu_custom_call.1} parent=11 // pred_fallthru
          _
        // Predicated region
        $region65: #{tpu_custom_call.1} parent=11 // pred_check
          %p474 = pneg %p348
        $region66: #{tpu_custom_call.1} parent=11 // pred_check_branch
          %476 = sbr.rel (%p474) target = $region68
        $region67: #{tpu_custom_call.1} parent=11 // pred_region
          %s478 = ssub.s32 128, 128
          %479 = vsyncadd [#allocation13], %s478
          %s481 = sshll.u32 [#allocation12], 4
          %s482 = int_to_ptr.vmem [resolvable:$true] %s481
          %484 = dma.hbm_to_vmem [thread:$0]  %s14, 128, %s482, [#allocation13]
        $region68: #{tpu_custom_call.1} parent=11 // pred_fallthru
          _
      $region12: #{tpu_custom_call.1} parent=5 // pred_fallthru
        _
      %p485 = scmp.lt.s32.totalorder %s28, 2
      // Predicated region
      $region69: #{tpu_custom_call.1} parent=5 // pred_check
        %p486 = pneg %p485
      $region70: #{tpu_custom_call.1} parent=5 // pred_check_branch
        %488 = sbr.rel (%p486) target = $region72
      $region71: #{tpu_custom_call.1} parent=5 // pred_region
        // Predicated region
        $region73: #{tpu_custom_call.1} parent=71 // pred_check
          %p489 = pneg %p48
        $region74: #{tpu_custom_call.1} parent=71 // pred_check_branch
          %491 = sbr.rel (%p489) target = $region76
        $region75: #{tpu_custom_call.1} parent=71 // pred_region
          %p492 = scmp.lt.s32.totalorder %s28, 1
          %s493 = scalar_select %p492, %s28, 1
          %s494 = smul.addr %s493, 8
          %s495 = scalar_lea.vmem %s0, %s494
        $region76: #{tpu_custom_call.1} parent=71 // pred_fallthru
          _
      $region72: #{tpu_custom_call.1} parent=5 // pred_fallthru
        _
      %p496 = scmp.le.s32.totalorder 1, %s28
      %p497 = scmp.lt.s32.totalorder %s28, 3
      %p498 = pnand %p496, %p497
      %p499 = pneg %p498
      // Predicated region
      $region77: #{tpu_custom_call.1} parent=5 // pred_check
        _
      $region78: #{tpu_custom_call.1} parent=5 // pred_check_branch
        %501 = sbr.rel (%p498) target = $region80
      $region79: #{tpu_custom_call.1} parent=5 // pred_region
        %s502 = ssub.s32 %s28, 1
        // Predicated region
        $region81: #{tpu_custom_call.1} parent=79 // pred_check
          %p503 = pneg %p75
        $region82: #{tpu_custom_call.1} parent=79 // pred_check_branch
          %505 = sbr.rel (%p503) target = $region84
        $region83: #{tpu_custom_call.1} parent=79 // pred_region
          %506 = dma.done [#allocation4], 128
        $region84: #{tpu_custom_call.1} parent=79 // pred_fallthru
          _
        // Predicated region
        $region85: #{tpu_custom_call.1} parent=79 // pred_check
          %p507 = pneg %p180
        $region86: #{tpu_custom_call.1} parent=79 // pred_check_branch
          %509 = sbr.rel (%p507) target = $region88
        $region87: #{tpu_custom_call.1} parent=79 // pred_region
          %510 = dma.done [#allocation7], 256
        $region88: #{tpu_custom_call.1} parent=79 // pred_fallthru
          _
        // Predicated region
        $region89: #{tpu_custom_call.1} parent=79 // pred_check
          %p511 = pneg %p243
        $region90: #{tpu_custom_call.1} parent=79 // pred_check_branch
          %513 = sbr.rel (%p511) target = $region92
        $region91: #{tpu_custom_call.1} parent=79 // pred_region
          %514 = dma.done [#allocation7], 256
        $region92: #{tpu_custom_call.1} parent=79 // pred_fallthru
          _
        // Predicated region
        $region93: #{tpu_custom_call.1} parent=79 // pred_check
          %p515 = pneg %p264
        $region94: #{tpu_custom_call.1} parent=79 // pred_check_branch
          %517 = sbr.rel (%p515) target = $region96
        $region95: #{tpu_custom_call.1} parent=79 // pred_region
          %518 = dma.done [#allocation10], 256
        $region96: #{tpu_custom_call.1} parent=79 // pred_fallthru
          _
        // Predicated region
        $region97: #{tpu_custom_call.1} parent=79 // pred_check
          %p519 = pneg %p327
        $region98: #{tpu_custom_call.1} parent=79 // pred_check_branch
          %521 = sbr.rel (%p519) target = $region100
        $region99: #{tpu_custom_call.1} parent=79 // pred_region
          %522 = dma.done [#allocation10], 128
        $region100: #{tpu_custom_call.1} parent=79 // pred_fallthru
          _
        // Predicated region
        $region101: #{tpu_custom_call.1} parent=79 // pred_check
          %p523 = pneg %p348
        $region102: #{tpu_custom_call.1} parent=79 // pred_check_branch
          %525 = sbr.rel (%p523) target = $region104
        $region103: #{tpu_custom_call.1} parent=79 // pred_region
          %526 = dma.done [#allocation13], 128
        $region104: #{tpu_custom_call.1} parent=79 // pred_fallthru
          _
        %p527 = scmp.lt.s32.totalorder %s33, 1
        %s528 = scalar_select %p527, %s33, 1
        %s529 = smul.addr %s528, 8
        %s530 = scalar_lea.vmem %s0, %s529
        %p531 = pneg %p54
        %p532 = pneg %p51
        %p533 = pneg %p75
        %p534 = pneg %p72
        %p535 = pneg %p96
        %p536 = pneg %p93
        %p537 = pneg %p117
        %p538 = pneg %p114
        %p539 = pneg %p138
        %p540 = pneg %p135
        %p541 = pneg %p159
        %p542 = pneg %p156
        %p543 = pneg %p180
        %p544 = pneg %p177
        %p545 = pneg %p201
        %p546 = pneg %p198
        %p547 = pneg %p222
        %p548 = pneg %p219
        %p549 = pneg %p243
        %p550 = pneg %p240
        %p551 = pneg %p264
        %p552 = pneg %p261
        %p553 = pneg %p285
        %p554 = pneg %p282
        %p555 = pneg %p306
        %p556 = pneg %p303
        %p557 = pneg %p327
        %p558 = pneg %p324
        %p559 = pneg %p348
        %p560 = pneg %p345
        %p561 = pneg %p374
        %p562 = pneg %p371
        %s563 = sand.u32 %s361, 1
        %s564 = scalar_lea.sflag [#allocation5], %s563
        %s565 = sand.u32 %s361, 1
        %s566 = smul.addr %s565, 8
        %s567 = scalar_lea.vmem [#allocation14], %s566
        %p568 = scmp.lt.s32.totalorder %s33, 1
        %s569 = scalar_select %p568, %s33, 1
        %s570 = smul.addr %s569, 8
        %s571 = scalar_lea.vmem %s0, %s570
        %v572 = vld [vmem:[#allocation3] sm:$0xff]
        %v573 = vld [vmem:[%s571] sm:$0xff]
        %v574 = vld [vmem:[%s2] sm:$0xff]
        %576 = vset.pattern.permute.xlu0 0
        %577 = vperm.xlu0 %576, %v574
        %v578 = vpop.permute.xlu0 %577
        %vm580 = vcmask 64512
        %v582 = vsel %vm580, %v572, 0
        %584 = vmatprep.subr.mxu0 0.0
        %585 = vmatpush1.msra.mxu0 0.0
        %586 = vmatprep.subr.mxu0 0.0
        %587 = vmatpush1.msra.mxu0 0.0
        %588 = vmatprep.subr.mxu0 0.0
        %589 = vmatpush1.msra.mxu0 0.0
        %590 = vmatprep.subr.mxu0 0.0
        %591 = vmatpush1.msra.mxu0 0.0
        %592 = vmatprep.subr.mxu0 0.0
        %593 = vmatpush1.msra.mxu0 0.0
        %594 = vmatprep.subr.mxu0 0.0
        %595 = vmatpush1.msra.mxu0 0.0
        %596 = vmatprep.subr.mxu0 0.0
        %597 = vmatpush1.msra.mxu0 0.0
        %598 = vmatprep.subr.mxu0 0.0
        %599 = vmatpush1.msra.mxu0 0.0
        %600 = vmatprep.subr.mxu0 0.0
        %601 = vmatpush1.msra.mxu0 0.0
        %602 = vmatprep.subr.mxu0 0.0
        %603 = vmatpush1.msra.mxu0 0.0
        %604 = vmatprep.subr.mxu0 0.0
        %605 = vmatpush1.msra.mxu0 0.0
        %606 = vmatprep.subr.mxu0 0.0
        %607 = vmatpush1.msra.mxu0 0.0
        %608 = vmatprep.subr.mxu0 0.0
        %609 = vmatpush1.msra.mxu0 0.0
        %610 = vmatprep.subr.mxu0 0.0
        %611 = vmatpush1.msra.mxu0 0.0
        %612 = vmatprep.subr.mxu0 0.0
        %613 = vmatpush1.msra.mxu0 0.0
        %614 = vmatprep.subr.mxu0 0.0
        %615 = vmatpush1.msra.mxu0 %v573
        %616 = vmatprep.subr.mxu0 0.0
        %617 = vmatpush2.msra.mxu0 0.0
        %618 = vmatprep.subr.mxu0 0.0
        %619 = vmatpush2.msra.mxu0 0.0
        %620 = vmatprep.subr.mxu0 0.0
        %621 = vmatpush2.msra.mxu0 0.0
        %622 = vmatprep.subr.mxu0 0.0
        %623 = vmatpush2.msra.mxu0 0.0
        %624 = vmatprep.subr.mxu0 0.0
        %625 = vmatpush2.msra.mxu0 0.0
        %626 = vmatprep.subr.mxu0 0.0
        %627 = vmatpush2.msra.mxu0 0.0
        %628 = vmatprep.subr.mxu0 0.0
        %629 = vmatpush2.msra.mxu0 0.0
        %630 = vmatprep.subr.mxu0 0.0
        %631 = vmatpush2.msra.mxu0 0.0
        %632 = vmatprep.subr.mxu0 0.0
        %633 = vmatpush2.msra.mxu0 0.0
        %634 = vmatprep.subr.mxu0 0.0
        %635 = vmatpush2.msra.mxu0 0.0
        %636 = vmatprep.subr.mxu0 0.0
        %637 = vmatpush2.msra.mxu0 0.0
        %638 = vmatprep.subr.mxu0 0.0
        %639 = vmatpush2.msra.mxu0 0.0
        %640 = vmatprep.subr.mxu0 0.0
        %641 = vmatpush2.msra.mxu0 0.0
        %642 = vmatprep.subr.mxu0 0.0
        %643 = vmatpush2.msra.mxu0 0.0
        %644 = vmatprep.subr.mxu0 0.0
        %645 = vmatpush2.msra.mxu0 0.0
        %646 = vmatprep.subr.mxu0 0.0
        %647 = vmatpush2.msra.mxu0 0.0
        %648 = vmatprep.mubr.f32.mxu0 0.0
        %649 = vmatmul.mubr.f32.gmra.mxu0 %v582
        %v650 = vpop.f32.mrf.mxu0
        %v651 = vadd.f32 %v578, %v650
        %v652 = vpop.f32.mrf.mxu0
        %653 = vdwg.mxu0
        %vm654 = vcmask 23552
        %655 = vst.msk [vmem:[#allocation2] sm:$0xff] %vm654, 0.0
        %vm656 = vcmask 310552
        %657 = vst.msk [vmem:[#allocation2] sm:$0xff] %vm656, 0.0
        %659 = vrot.lane.b32.xlu0 %v651, 3
        %v660 = vpop.permute.xlu0 %659
        %vm662 = vcmask 285720
        %663 = vst.msk [vmem:[#allocation2] sm:$0xff] %vm662, %v660
        %v664 = vld [vmem:[#allocation2] sm:$0xff]
        %666 = vrot.lane.b32.xlu0 %v664, 127
        %v667 = vpop.permute.xlu0 %666
        %669 = vrot.lane.b32.xlu0 %v664, 126
        %v670 = vpop.permute.xlu0 %669
        %672 = vrot.lane.b32.xlu0 %v664, 125
        %v673 = vpop.permute.xlu0 %672
        %675 = vrot.lane.b32.xlu0 %v664, 124
        %v676 = vpop.permute.xlu0 %675
        %678 = vrot.lane.b32.xlu0 %v664, 123
        %v679 = vpop.permute.xlu0 %678
        %681 = vrot.lane.b32.xlu0 %v664, 122
        %v682 = vpop.permute.xlu0 %681
        %v684 = vld [vmem:[%s3] sm:$0xff]
        %v685 = vld [vmem:[%s3 + $0x8] sm:$0xff]
        %v686 = vld [vmem:[%s4] sm:$0xff]
        %v687 = vld [vmem:[%s4 + $0x8] sm:$0xff]
        %689 = vset.pattern.permute.xlu0 0
        %690 = vperm.xlu0 %689, %v686
        %v691 = vpop.permute.xlu0 %690
        %694 = vset.pattern.permute.xlu0 0
        %695 = vperm.xlu0 %694, %v687
        %v696 = vpop.permute.xlu0 %695
        %vm698 = vcmask 457728
        %v700 = vsel %vm698, %v684, 0
        %v703 = vsel %vm698, %v685, 0
        %705 = vmatprep.subr.mxu0 0.0
        %706 = vmatpush1.msra.mxu0 0.0
        %707 = vmatprep.subr.mxu0 0.0
        %708 = vmatpush1.msra.mxu0 0.0
        %709 = vmatprep.subr.mxu0 0.0
        %710 = vmatpush1.msra.mxu0 0.0
        %711 = vmatprep.subr.mxu0 0.0
        %712 = vmatpush1.msra.mxu0 0.0
        %713 = vmatprep.subr.mxu0 0.0
        %714 = vmatpush1.msra.mxu0 0.0
        %715 = vmatprep.subr.mxu0 0.0
        %716 = vmatpush1.msra.mxu0 0.0
        %717 = vmatprep.subr.mxu0 0.0
        %718 = vmatpush1.msra.mxu0 0.0
        %719 = vmatprep.subr.mxu0 0.0
        %720 = vmatpush1.msra.mxu0 0.0
        %721 = vmatprep.subr.mxu0 0.0
        %722 = vmatpush1.msra.mxu0 0.0
        %723 = vmatprep.subr.mxu0 0.0
        %724 = vmatpush1.msra.mxu0 %v682
        %725 = vmatprep.subr.mxu0 0.0
        %726 = vmatpush1.msra.mxu0 %v679
        %727 = vmatprep.subr.mxu0 0.0
        %728 = vmatpush1.msra.mxu0 %v676
        %729 = vmatprep.subr.mxu0 0.0
        %730 = vmatpush1.msra.mxu0 %v673
        %731 = vmatprep.subr.mxu0 0.0
        %732 = vmatpush1.msra.mxu0 %v670
        %733 = vmatprep.subr.mxu0 0.0
        %734 = vmatpush1.msra.mxu0 %v667
        %735 = vmatprep.subr.mxu0 0.0
        %736 = vmatpush1.msra.mxu0 %v664
        %737 = vmatprep.subr.mxu0 0.0
        %738 = vmatpush2.msra.mxu0 0.0
        %739 = vmatprep.subr.mxu0 0.0
        %740 = vmatpush2.msra.mxu0 0.0
        %741 = vmatprep.subr.mxu0 0.0
        %742 = vmatpush2.msra.mxu0 0.0
        %743 = vmatprep.subr.mxu0 0.0
        %744 = vmatpush2.msra.mxu0 0.0
        %745 = vmatprep.subr.mxu0 0.0
        %746 = vmatpush2.msra.mxu0 0.0
        %747 = vmatprep.subr.mxu0 0.0
        %748 = vmatpush2.msra.mxu0 0.0
        %749 = vmatprep.subr.mxu0 0.0
        %750 = vmatpush2.msra.mxu0 0.0
        %751 = vmatprep.subr.mxu0 0.0
        %752 = vmatpush2.msra.mxu0 0.0
        %753 = vmatprep.subr.mxu0 0.0
        %754 = vmatpush2.msra.mxu0 0.0
        %755 = vmatprep.subr.mxu0 0.0
        %756 = vmatpush2.msra.mxu0 0.0
        %757 = vmatprep.subr.mxu0 0.0
        %758 = vmatpush2.msra.mxu0 0.0
        %759 = vmatprep.subr.mxu0 0.0
        %760 = vmatpush2.msra.mxu0 0.0
        %761 = vmatprep.subr.mxu0 0.0
        %762 = vmatpush2.msra.mxu0 0.0
        %763 = vmatprep.subr.mxu0 0.0
        %764 = vmatpush2.msra.mxu0 0.0
        %765 = vmatprep.subr.mxu0 0.0
        %766 = vmatpush2.msra.mxu0 0.0
        %767 = vmatprep.subr.mxu0 0.0
        %768 = vmatpush2.msra.mxu0 0.0
        %769 = vmatprep.mubr.f32.mxu0 0.0
        %770 = vmatmul.mubr.f32.gmra.mxu0 %v700
        %v771 = vpop.f32.mrf.mxu0
        %v772 = vadd.f32 %v691, %v771
        %v773 = vpop.f32.mrf.mxu0
        %774 = vmatprep.mubr.f32.mxu0 0.0
        %775 = vmatmul.mubr.f32.gmra.mxu0 %v703
        %v776 = vpop.f32.mrf.mxu0
        %v777 = vadd.f32 %v696, %v776
        %v778 = vpop.f32.mrf.mxu0
        %779 = vdwg.mxu0
        %vm780 = vcmask 261120
        %v781 = vsel %vm780, %v772, 0.0
        %v782 = vsel %vm780, %v777, 0.0
        %v783 = vadd.f32 %v781, %v782
        %784 = vadd.xlane.f32.xlu0 %v783
        %v785 = vpop.xlane.xlu0 %784
        %v786 = vrot.slane %v785, 4
        %v787 = vadd.f32 %v785, %v786
        %v788 = vrot.slane %v787, 2
        %v789 = vadd.f32 %v787, %v788
        %v790 = vrot.slane %v789, 1
        %v791 = vadd.f32 %v789, %v790
        %s792 = vtos %v791
        %v793 = vmul.f32 %v772, %v772
        %v794 = vmul.f32 %v777, %v777
        %v795 = vsel %vm780, %v793, 0.0
        %v796 = vsel %vm780, %v794, 0.0
        %v797 = vadd.f32 %v795, %v796
        %798 = vadd.xlane.f32.xlu0 %v797
        %v799 = vpop.xlane.xlu0 %798
        %v800 = vrot.slane %v799, 4
        %v801 = vadd.f32 %v799, %v800
        %v802 = vrot.slane %v801, 2
        %v803 = vadd.f32 %v801, %v802
        %v804 = vrot.slane %v803, 1
        %v805 = vadd.f32 %v803, %v804
        %s806 = vtos %v805
        %v807 = vrcp.pop 512.0
        %s808 = vtos %v807
        %s809 = smul.f32 %s792, %s808
        %v810 = vrcp.pop 512.0
        %s811 = vtos %v810
        %s812 = smul.f32 %s806, %s811
        %s813 = smul.f32 %s809, %s809
        %s814 = ssub.f32 %s812, %s813
        %s815 = smax.f32 %s814, 0.0
        %v816 = vstv %s809
        %v817 = vsub.f32 %v772, %v816
        %v818 = vsub.f32 %v777, %v816
        %s819 = sadd.f32 %s815, 1e-05
        %v820 = vstv %s819
        %v821 = vrsqrt.pop %v820
        %s822 = vtos %v821
        %v823 = vstv %s822
        %v824 = vmul.f32 %v817, %v823
        %v825 = vmul.f32 %v818, %v823
        %v826 = vld [vmem:[%s5] sm:$0xff]
        %v827 = vld [vmem:[%s5 + $0x8] sm:$0xff]
        %v828 = vmul.f32 %v824, %v826
        %v829 = vmul.f32 %v825, %v827
        %v830 = vld [vmem:[#allocation6] sm:$0xff]
        %v831 = vld [vmem:[#allocation6 + $0x8] sm:$0xff]
        %v832 = vadd.f32 %v828, %v830
        %v833 = vadd.f32 %v829, %v831
        %v834 = vmul.f32 %v832, 0.01
        %v835 = vmul.f32 %v833, 0.01
        %v836 = vmax.f32 %v832, %v834
        %v837 = vmax.f32 %v833, %v835
        %vm838 = vcmask 15360
        %839 = vst.msk [vmem:[#allocation2] sm:$0xff] %vm838, 0.0
        %840 = vst.msk [vmem:[#allocation2 + $0x8] sm:$0xff] %vm838, 0.0
        %vm841 = vcmask 302352
        %842 = vst.msk [vmem:[#allocation2] sm:$0xff] %vm841, 0.0
        %843 = vst.msk [vmem:[#allocation2 + $0x8] sm:$0xff] %vm841, 0.0
        %846 = vrot.lane.b32.xlu0 %v836, 2
        %v847 = vpop.permute.xlu0 %846
        %848 = vrot.lane.b32.xlu0 %v837, 2
        %v849 = vpop.permute.xlu0 %848
        %vm852 = vcmask 277520
        %853 = vst.msk [vmem:[#allocation2] sm:$0xff] %vm852, %v847
        %854 = vst.msk [vmem:[#allocation2 + $0x8] sm:$0xff] %vm852, %v849
        %v855 = vld [vmem:[#allocation2] sm:$0xff]
        %v856 = vld [vmem:[#allocation2 + $0x8] sm:$0xff]
        %859 = vrot.lane.b32.xlu0 %v855, 127
        %v860 = vpop.permute.xlu0 %859
        %861 = vrot.lane.b32.xlu0 %v856, 127
        %v862 = vpop.permute.xlu0 %861
        %865 = vrot.lane.b32.xlu0 %v855, 126
        %v866 = vpop.permute.xlu0 %865
        %867 = vrot.lane.b32.xlu0 %v856, 126
        %v868 = vpop.permute.xlu0 %867
        %871 = vrot.lane.b32.xlu0 %v855, 125
        %v872 = vpop.permute.xlu0 %871
        %873 = vrot.lane.b32.xlu0 %v856, 125
        %v874 = vpop.permute.xlu0 %873
        %877 = vrot.lane.b32.xlu0 %v855, 124
        %v878 = vpop.permute.xlu0 %877
        %879 = vrot.lane.b32.xlu0 %v856, 124
        %v880 = vpop.permute.xlu0 %879
        %883 = vrot.lane.b32.xlu0 %v855, 123
        %v884 = vpop.permute.xlu0 %883
        %885 = vrot.lane.b32.xlu0 %v856, 123
        %v886 = vpop.permute.xlu0 %885
        %v889 = vld [vmem:[%s7] sm:$0xff]
        %v890 = vld [vmem:[%s7 + $0x8] sm:$0xff]
        %v891 = vld [vmem:[%s8] sm:$0xff]
        %v892 = vld [vmem:[%s8 + $0x8] sm:$0xff]
        %894 = vset.pattern.permute.xlu0 0
        %895 = vperm.xlu0 %894, %v891
        %v896 = vpop.permute.xlu0 %895
        %899 = vset.pattern.permute.xlu0 0
        %900 = vperm.xlu0 %899, %v892
        %v901 = vpop.permute.xlu0 %900
        %vm903 = vcmask 785408
        %v905 = vsel %vm903, %v889, 0
        %v908 = vsel %vm903, %v890, 0
        %910 = vmatprep.subr.mxu0 0.0
        %911 = vmatpush1.msra.mxu0 0.0
        %912 = vmatprep.subr.mxu0 0.0
        %913 = vmatpush1.msra.mxu0 0.0
        %914 = vmatprep.subr.mxu0 0.0
        %915 = vmatpush1.msra.mxu0 0.0
        %916 = vmatprep.subr.mxu0 0.0
        %917 = vmatpush1.msra.mxu0 0.0
        %918 = vmatprep.subr.mxu0 0.0
        %919 = vmatpush1.msra.mxu0 %v886
        %920 = vmatprep.subr.mxu0 0.0
        %921 = vmatpush1.msra.mxu0 %v884
        %922 = vmatprep.subr.mxu0 0.0
        %923 = vmatpush1.msra.mxu0 %v880
        %924 = vmatprep.subr.mxu0 0.0
        %925 = vmatpush1.msra.mxu0 %v878
        %926 = vmatprep.subr.mxu0 0.0
        %927 = vmatpush1.msra.mxu0 %v874
        %928 = vmatprep.subr.mxu0 0.0
        %929 = vmatpush1.msra.mxu0 %v872
        %930 = vmatprep.subr.mxu0 0.0
        %931 = vmatpush1.msra.mxu0 %v868
        %932 = vmatprep.subr.mxu0 0.0
        %933 = vmatpush1.msra.mxu0 %v866
        %934 = vmatprep.subr.mxu0 0.0
        %935 = vmatpush1.msra.mxu0 %v862
        %936 = vmatprep.subr.mxu0 0.0
        %937 = vmatpush1.msra.mxu0 %v860
        %938 = vmatprep.subr.mxu0 0.0
        %939 = vmatpush1.msra.mxu0 %v856
        %940 = vmatprep.subr.mxu0 0.0
        %941 = vmatpush1.msra.mxu0 %v855
        %942 = vmatprep.subr.mxu0 0.0
        %943 = vmatpush2.msra.mxu0 0.0
        %944 = vmatprep.subr.mxu0 0.0
        %945 = vmatpush2.msra.mxu0 0.0
        %946 = vmatprep.subr.mxu0 0.0
        %947 = vmatpush2.msra.mxu0 0.0
        %948 = vmatprep.subr.mxu0 0.0
        %949 = vmatpush2.msra.mxu0 0.0
        %950 = vmatprep.subr.mxu0 0.0
        %951 = vmatpush2.msra.mxu0 0.0
        %952 = vmatprep.subr.mxu0 0.0
        %953 = vmatpush2.msra.mxu0 0.0
        %954 = vmatprep.subr.mxu0 0.0
        %955 = vmatpush2.msra.mxu0 0.0
        %956 = vmatprep.subr.mxu0 0.0
        %957 = vmatpush2.msra.mxu0 0.0
        %958 = vmatprep.subr.mxu0 0.0
        %959 = vmatpush2.msra.mxu0 0.0
        %960 = vmatprep.subr.mxu0 0.0
        %961 = vmatpush2.msra.mxu0 0.0
        %962 = vmatprep.subr.mxu0 0.0
        %963 = vmatpush2.msra.mxu0 0.0
        %964 = vmatprep.subr.mxu0 0.0
        %965 = vmatpush2.msra.mxu0 0.0
        %966 = vmatprep.subr.mxu0 0.0
        %967 = vmatpush2.msra.mxu0 0.0
        %968 = vmatprep.subr.mxu0 0.0
        %969 = vmatpush2.msra.mxu0 0.0
        %970 = vmatprep.subr.mxu0 0.0
        %971 = vmatpush2.msra.mxu0 0.0
        %972 = vmatprep.subr.mxu0 0.0
        %973 = vmatpush2.msra.mxu0 0.0
        %974 = vmatprep.mubr.f32.mxu0 0.0
        %975 = vmatmul.mubr.f32.gmra.mxu0 %v905
        %v976 = vpop.f32.mrf.mxu0
        %v977 = vadd.f32 %v896, %v976
        %v978 = vpop.f32.mrf.mxu0
        %979 = vmatprep.mubr.f32.mxu0 0.0
        %980 = vmatmul.mubr.f32.gmra.mxu0 %v908
        %v981 = vpop.f32.mrf.mxu0
        %v982 = vadd.f32 %v901, %v981
        %v983 = vpop.f32.mrf.mxu0
        %984 = vdwg.mxu0
        %v985 = vsel %vm780, %v977, 0.0
        %v986 = vsel %vm780, %v982, 0.0
        %v987 = vadd.f32 %v985, %v986
        %988 = vadd.xlane.f32.xlu0 %v987
        %v989 = vpop.xlane.xlu0 %988
        %v990 = vrot.slane %v989, 4
        %v991 = vadd.f32 %v989, %v990
        %v992 = vrot.slane %v991, 2
        %v993 = vadd.f32 %v991, %v992
        %v994 = vrot.slane %v993, 1
        %v995 = vadd.f32 %v993, %v994
        %s996 = vtos %v995
        %v997 = vmul.f32 %v977, %v977
        %v998 = vmul.f32 %v982, %v982
        %v999 = vsel %vm780, %v997, 0.0
        %v1000 = vsel %vm780, %v998, 0.0
        %v1001 = vadd.f32 %v999, %v1000
        %1002 = vadd.xlane.f32.xlu0 %v1001
        %v1003 = vpop.xlane.xlu0 %1002
        %v1004 = vrot.slane %v1003, 4
        %v1005 = vadd.f32 %v1003, %v1004
        %v1006 = vrot.slane %v1005, 2
        %v1007 = vadd.f32 %v1005, %v1006
        %v1008 = vrot.slane %v1007, 1
        %v1009 = vadd.f32 %v1007, %v1008
        %s1010 = vtos %v1009
        %v1011 = vrcp.pop 512.0
        %s1012 = vtos %v1011
        %s1013 = smul.f32 %s996, %s1012
        %v1014 = vrcp.pop 512.0
        %s1015 = vtos %v1014
        %s1016 = smul.f32 %s1010, %s1015
        %s1017 = smul.f32 %s1013, %s1013
        %s1018 = ssub.f32 %s1016, %s1017
        %s1019 = smax.f32 %s1018, 0.0
        %v1020 = vstv %s1013
        %v1021 = vsub.f32 %v977, %v1020
        %v1022 = vsub.f32 %v982, %v1020
        %s1023 = sadd.f32 %s1019, 1e-05
        %v1024 = vstv %s1023
        %v1025 = vrsqrt.pop %v1024
        %s1026 = vtos %v1025
        %v1027 = vstv %s1026
        %v1028 = vmul.f32 %v1021, %v1027
        %v1029 = vmul.f32 %v1022, %v1027
        %v1030 = vld [vmem:[#allocation8] sm:$0xff]
        %v1031 = vld [vmem:[#allocation8 + $0x8] sm:$0xff]
        %v1032 = vmul.f32 %v1028, %v1030
        %v1033 = vmul.f32 %v1029, %v1031
        %v1034 = vld [vmem:[#allocation9] sm:$0xff]
        %v1035 = vld [vmem:[#allocation9 + $0x8] sm:$0xff]
        %v1036 = vadd.f32 %v1032, %v1034
        %v1037 = vadd.f32 %v1033, %v1035
        %v1038 = vmul.f32 %v1036, 0.01
        %v1039 = vmul.f32 %v1037, 0.01
        %v1040 = vmax.f32 %v1036, %v1038
        %v1041 = vmax.f32 %v1037, %v1039
        %1042 = vst.msk [vmem:[#allocation2] sm:$0xff] %vm838, 0.0
        %1043 = vst.msk [vmem:[#allocation2 + $0x8] sm:$0xff] %vm838, 0.0
        %vm1044 = vcmask 294160
        %1045 = vst.msk [vmem:[#allocation2] sm:$0xff] %vm1044, 0.0
        %1046 = vst.msk [vmem:[#allocation2 + $0x8] sm:$0xff] %vm1044, 0.0
        %1049 = vrot.lane.b32.xlu0 %v1040, 2
        %v1050 = vpop.permute.xlu0 %1049
        %1051 = vrot.lane.b32.xlu0 %v1041, 2
        %v1052 = vpop.permute.xlu0 %1051
        %1055 = vst.msk [vmem:[#allocation2] sm:$0xff] %vm852, %v1050
        %1056 = vst.msk [vmem:[#allocation2 + $0x8] sm:$0xff] %vm852, %v1052
        %v1057 = vld [vmem:[#allocation2] sm:$0xff]
        %v1058 = vld [vmem:[#allocation2 + $0x8] sm:$0xff]
        %1061 = vrot.lane.b32.xlu0 %v1057, 127
        %v1062 = vpop.permute.xlu0 %1061
        %1063 = vrot.lane.b32.xlu0 %v1058, 127
        %v1064 = vpop.permute.xlu0 %1063
        %1067 = vrot.lane.b32.xlu0 %v1057, 126
        %v1068 = vpop.permute.xlu0 %1067
        %1069 = vrot.lane.b32.xlu0 %v1058, 126
        %v1070 = vpop.permute.xlu0 %1069
        %1073 = vrot.lane.b32.xlu0 %v1057, 125
        %v1074 = vpop.permute.xlu0 %1073
        %1075 = vrot.lane.b32.xlu0 %v1058, 125
        %v1076 = vpop.permute.xlu0 %1075
        %1079 = vrot.lane.b32.xlu0 %v1057, 124
        %v1080 = vpop.permute.xlu0 %1079
        %1081 = vrot.lane.b32.xlu0 %v1058, 124
        %v1082 = vpop.permute.xlu0 %1081
        %v1085 = vld [vmem:[%s11] sm:$0xff]
        %v1086 = vld [vmem:[%s12] sm:$0xff]
        %1088 = vset.pattern.permute.xlu0 0
        %1089 = vperm.xlu0 %1088, %v1086
        %v1090 = vpop.permute.xlu0 %1089
        %vm1092 = vcmask 654336
        %v1094 = vsel %vm1092, %v1085, 0
        %1096 = vmatprep.subr.mxu0 0.0
        %1097 = vmatpush1.msra.mxu0 0.0
        %1098 = vmatprep.subr.mxu0 0.0
        %1099 = vmatpush1.msra.mxu0 0.0
        %1100 = vmatprep.subr.mxu0 0.0
        %1101 = vmatpush1.msra.mxu0 0.0
        %1102 = vmatprep.subr.mxu0 0.0
        %1103 = vmatpush1.msra.mxu0 0.0
        %1104 = vmatprep.subr.mxu0 0.0
        %1105 = vmatpush1.msra.mxu0 0.0
        %1106 = vmatprep.subr.mxu0 0.0
        %1107 = vmatpush1.msra.mxu0 0.0
        %1108 = vmatprep.subr.mxu0 0.0
        %1109 = vmatpush1.msra.mxu0 %v1082
        %1110 = vmatprep.subr.mxu0 0.0
        %1111 = vmatpush1.msra.mxu0 %v1080
        %1112 = vmatprep.subr.mxu0 0.0
        %1113 = vmatpush1.msra.mxu0 %v1076
        %1114 = vmatprep.subr.mxu0 0.0
        %1115 = vmatpush1.msra.mxu0 %v1074
        %1116 = vmatprep.subr.mxu0 0.0
        %1117 = vmatpush1.msra.mxu0 %v1070
        %1118 = vmatprep.subr.mxu0 0.0
        %1119 = vmatpush1.msra.mxu0 %v1068
        %1120 = vmatprep.subr.mxu0 0.0
        %1121 = vmatpush1.msra.mxu0 %v1064
        %1122 = vmatprep.subr.mxu0 0.0
        %1123 = vmatpush1.msra.mxu0 %v1062
        %1124 = vmatprep.subr.mxu0 0.0
        %1125 = vmatpush1.msra.mxu0 %v1058
        %1126 = vmatprep.subr.mxu0 0.0
        %1127 = vmatpush1.msra.mxu0 %v1057
        %1128 = vmatprep.subr.mxu0 0.0
        %1129 = vmatpush2.msra.mxu0 0.0
        %1130 = vmatprep.subr.mxu0 0.0
        %1131 = vmatpush2.msra.mxu0 0.0
        %1132 = vmatprep.subr.mxu0 0.0
        %1133 = vmatpush2.msra.mxu0 0.0
        %1134 = vmatprep.subr.mxu0 0.0
        %1135 = vmatpush2.msra.mxu0 0.0
        %1136 = vmatprep.subr.mxu0 0.0
        %1137 = vmatpush2.msra.mxu0 0.0
        %1138 = vmatprep.subr.mxu0 0.0
        %1139 = vmatpush2.msra.mxu0 0.0
        %1140 = vmatprep.subr.mxu0 0.0
        %1141 = vmatpush2.msra.mxu0 0.0
        %1142 = vmatprep.subr.mxu0 0.0
        %1143 = vmatpush2.msra.mxu0 0.0
        %1144 = vmatprep.subr.mxu0 0.0
        %1145 = vmatpush2.msra.mxu0 0.0
        %1146 = vmatprep.subr.mxu0 0.0
        %1147 = vmatpush2.msra.mxu0 0.0
        %1148 = vmatprep.subr.mxu0 0.0
        %1149 = vmatpush2.msra.mxu0 0.0
        %1150 = vmatprep.subr.mxu0 0.0
        %1151 = vmatpush2.msra.mxu0 0.0
        %1152 = vmatprep.subr.mxu0 0.0
        %1153 = vmatpush2.msra.mxu0 0.0
        %1154 = vmatprep.subr.mxu0 0.0
        %1155 = vmatpush2.msra.mxu0 0.0
        %1156 = vmatprep.subr.mxu0 0.0
        %1157 = vmatpush2.msra.mxu0 0.0
        %1158 = vmatprep.subr.mxu0 0.0
        %1159 = vmatpush2.msra.mxu0 0.0
        %1160 = vmatprep.mubr.f32.mxu0 0.0
        %1161 = vmatmul.mubr.f32.gmra.mxu0 %v1094
        %v1162 = vpop.f32.mrf.mxu0
        %v1163 = vadd.f32 %v1090, %v1162
        %v1164 = vpop.f32.mrf.mxu0
        %1165 = vdwg.mxu0
        %v1166 = vsel %vm780, %v1163, 0.0
        %1167 = vadd.xlane.f32.xlu0 %v1166
        %v1168 = vpop.xlane.xlu0 %1167
        %v1169 = vrot.slane %v1168, 4
        %v1170 = vadd.f32 %v1168, %v1169
        %v1171 = vrot.slane %v1170, 2
        %v1172 = vadd.f32 %v1170, %v1171
        %v1173 = vrot.slane %v1172, 1
        %v1174 = vadd.f32 %v1172, %v1173
        %s1175 = vtos %v1174
        %v1176 = vmul.f32 %v1163, %v1163
        %v1177 = vsel %vm780, %v1176, 0.0
        %1178 = vadd.xlane.f32.xlu0 %v1177
        %v1179 = vpop.xlane.xlu0 %1178
        %v1180 = vrot.slane %v1179, 4
        %v1181 = vadd.f32 %v1179, %v1180
        %v1182 = vrot.slane %v1181, 2
        %v1183 = vadd.f32 %v1181, %v1182
        %v1184 = vrot.slane %v1183, 1
        %v1185 = vadd.f32 %v1183, %v1184
        %s1186 = vtos %v1185
        %v1187 = vrcp.pop 256.0
        %s1188 = vtos %v1187
        %s1189 = smul.f32 %s1175, %s1188
        %v1190 = vrcp.pop 256.0
        %s1191 = vtos %v1190
        %s1192 = smul.f32 %s1186, %s1191
        %s1193 = smul.f32 %s1189, %s1189
        %s1194 = ssub.f32 %s1192, %s1193
        %s1195 = smax.f32 %s1194, 0.0
        %v1196 = vstv %s1189
        %v1197 = vsub.f32 %v1163, %v1196
        %s1198 = sadd.f32 %s1195, 1e-05
        %v1199 = vstv %s1198
        %v1200 = vrsqrt.pop %v1199
        %s1201 = vtos %v1200
        %v1202 = vstv %s1201
        %v1203 = vmul.f32 %v1197, %v1202
        %v1204 = vld [vmem:[#allocation11] sm:$0xff]
        %v1205 = vmul.f32 %v1203, %v1204
        %v1206 = vld [vmem:[#allocation12] sm:$0xff]
        %v1207 = vadd.f32 %v1205, %v1206
        %v1208 = vmul.f32 %v1207, 0.01
        %v1209 = vmax.f32 %v1207, %v1208
        %1210 = vst.msk [vmem:[%s567] sm:$0xff] %vm780, %v1209
        %s1211 = sand.u32 %s361, 1
        %s1212 = scalar_lea.sflag [#allocation5], %s1211
        %s1213 = sand.u32 %s361, 1
        %s1214 = smul.addr %s1213, 8
        %s1215 = scalar_lea.vmem [#allocation14], %s1214
        // Predicated region
        $region105: #{tpu_custom_call.1} parent=79 // pred_check
          %p1216 = pneg %p371
        $region106: #{tpu_custom_call.1} parent=79 // pred_check_branch
          %1218 = sbr.rel (%p1216) target = $region108
        $region107: #{tpu_custom_call.1} parent=79 // pred_region
          %s1220 = ssub.s32 128, 128
          %1221 = vsyncadd %s1212, %s1220
          %s1222 = smul.addr %s33, 128
          %s1223 = scalar_lea.hbm %s15, %s1222
          %s1225 = sshll.u32 %s1215, 4
          %s1226 = int_to_ptr.vmem [resolvable:$true] %s1225
          %1228 = dma.vmem_to_hbm [thread:$0]  %s1226, 128, %s1223, %s1212
        $region108: #{tpu_custom_call.1} parent=79 // pred_fallthru
          _
      $region80: #{tpu_custom_call.1} parent=5 // pred_fallthru
        _
      %p1229 = scmp.le.s32.totalorder 2, %s28
      // Predicated region
      $region109: #{tpu_custom_call.1} parent=5 // pred_check
        %p1230 = pneg %p1229
      $region110: #{tpu_custom_call.1} parent=5 // pred_check_branch
        %1232 = sbr.rel (%p1230) target = $region112
      $region111: #{tpu_custom_call.1} parent=5 // pred_region
        %s1233 = ssub.s32 %s28, 2
        // Predicated region
        $region113: #{tpu_custom_call.1} parent=111 // pred_check
          %p1234 = pneg %p377
        $region114: #{tpu_custom_call.1} parent=111 // pred_check_branch
          %1236 = sbr.rel (%p1234) target = $region116
        $region115: #{tpu_custom_call.1} parent=111 // pred_region
          %s1237 = sand.u32 %s362, 1
          %s1238 = scalar_lea.sflag [#allocation5], %s1237
          %s1239 = sand.u32 %s362, 1
          %s1240 = smul.addr %s1239, 8
          %s1241 = scalar_lea.vmem [#allocation14], %s1240
          %1242 = dma.done %s1238, 128
        $region116: #{tpu_custom_call.1} parent=111 // pred_fallthru
          _
      $region112: #{tpu_custom_call.1} parent=5 // pred_fallthru
        _
    $region6: #{tpu_custom_call.1} parent=1 // loop_footer
      %s32 = sadd.s32 1, %s28
    $region7: #{tpu_custom_call.1} parent=1 // loop_footer_branch
      %27 = sbr.rel target = $region3
    $region8: #{tpu_custom_call.1} parent=1 // loop_exit
      _
    %1243 = vsyncpa [#allocation4], 1
    %s1244 = scalar_lea.sflag [#allocation4], 1
    %1245 = vsyncpa %s1244, 1
    %1246 = vsyncpa [#allocation7], 1
    %1247 = vsyncpa [#allocation10], 1
    %1248 = vsyncpa [#allocation13], 1
    %1249 = vsyncpa [#allocation5], 1
    %s1250 = scalar_lea.sflag [#allocation5], 1
    %1251 = vsyncpa %s1250, 1

</llo_original>
